<compile_context>
chip_gen: v5e
topology: v5e:2x2
jax: 0.10.0
libtpu: 0.0.40
codegen_flags: <defaults>
</compile_context>

<pallas_src>
import jax
import jax.numpy as jnp
from jax import lax
from jax.experimental import pallas as pl
from jax.experimental.pallas import tpu as pltpu

EPS = 1e-5


def _make_kernel(H, W, C, PAD):
    HW = H * W
    # (sy, sx) spatial offsets of the 9 taps of a 3x3 conv with dilation=2, padding=2;
    # tap index k = ky*3 + kx matches the PyTorch (C_out, C_in, 3, 3) weight layout.
    offsets = [(sy, sx) for sy in (-2, 0, 2) for sx in (-2, 0, 2)]

    def kernel(xpad_ref, w1_ref, b1_ref, w2_ref, b2_ref, o_ref, hpad_ref):
        # xpad_ref : (C, L)     channel-major, lane-padded flattened-spatial input (one batch)
        # w*_ref   : (9, C, C)  per-tap (C_out, C_in) matrices
        # b*_ref   : (C, 1)
        # o_ref    : (C, HW)
        # hpad_ref : (C, L)     VMEM scratch for the padded stage-1 activation
        xcol = lax.broadcasted_iota(jnp.int32, (1, HW), 1) % W      # x coordinate per lane
        col_ok = {-2: xcol >= 2, 2: xcol < (W - 2)}                 # x-padding validity masks

        def conv_instnorm(src_ref, w_ref, b_ref):
            """Dilated 3x3 conv (9 lane-shifted MXU matmuls, f32 acc) + bias + InstanceNorm."""
            acc = jnp.zeros((C, HW), jnp.float32)
            for k, (sy, sx) in enumerate(offsets):
                start = PAD + sy * W + sx                 # static lane offset
                tap = src_ref[:, start:start + HW]        # (C_in, HW) shifted view
                if sx != 0:                               # x-direction zero padding
                    tap = jnp.where(col_ok[sx], tap, 0.0)
                acc = acc + jnp.dot(w_ref[k], tap, preferred_element_type=jnp.float32)
            acc = acc + b_ref[...]                        # (C, 1) broadcasts over lanes
            mean = jnp.mean(acc, axis=1, keepdims=True)   # per-(batch, channel) stats
            var = jnp.mean((acc - mean) ** 2, axis=1, keepdims=True)
            return (acc - mean) * lax.rsqrt(var + EPS)

        # stage 1: conv1 -> InstanceNorm -> ReLU   (stays entirely in VMEM)
        h = jnp.maximum(conv_instnorm(xpad_ref, w1_ref, b1_ref), 0.0)

        # re-pad the stage-1 activation in VMEM so stage-2 taps are again plain lane
        # slices; PAD and PAD+HW are multiples of 128 so all three stores are aligned.
        hpad_ref[:, 0:PAD] = jnp.zeros((C, PAD), jnp.float32)
        hpad_ref[:, PAD + HW:PAD + HW + PAD] = jnp.zeros((C, PAD), jnp.float32)
        hpad_ref[:, PAD:PAD + HW] = h

        # stage 2: conv2 -> InstanceNorm -> + residual
        y = conv_instnorm(hpad_ref, w2_ref, b2_ref)
        residual = xpad_ref[:, PAD:PAD + HW]
        o_ref[...] = (y + residual).astype(o_ref.dtype)

    return kernel


def residual_block_forward(x, w1, b1, w2, b2):
    """x: (B, C, H, W) float32. Returns (B, C, H, W), same semantics as the PyTorch module."""
    B, C, H, W = x.shape
    HW = H * W
    # Lane padding must cover max |shift| = 2*W + 2; round up to a multiple of 128 so
    # the central HW window stays vreg-aligned.
    PAD = ((2 * W + 2 + 127) // 128) * 128
    L = HW + 2 * PAD

    # channel-major layout: (B, C, HW) is just a reshape of NCHW (no HBM transpose),
    # zero-padded along the flattened-spatial lane axis.
    x_flat = x.reshape(B, C, HW)
    x_pad = jnp.pad(x_flat, ((0, 0), (0, 0), (PAD, PAD)))

    def to_tap_weights(w):                 # (C_out, C_in, 3, 3) -> (9, C_out, C_in)
        return jnp.transpose(w.reshape(C, C, 9), (2, 0, 1))

    w1_t, w2_t = to_tap_weights(w1), to_tap_weights(w2)
    b1_c, b2_c = b1.reshape(C, 1), b2.reshape(C, 1)

    out = pl.pallas_call(
        _make_kernel(H, W, C, PAD),
        out_shape=jax.ShapeDtypeStruct((B, C, HW), jnp.float32),
        grid_spec=pltpu.PrefetchScalarGridSpec(
            num_scalar_prefetch=0,
            grid=(B,),
            in_specs=[
                pl.BlockSpec((None, C, L), lambda b: (b, 0, 0)),   # padded input (this batch)
                pl.BlockSpec((9, C, C), lambda b: (0, 0, 0)),      # conv1 tap weights
                pl.BlockSpec((C, 1), lambda b: (0, 0)),            # conv1 bias
                pl.BlockSpec((9, C, C), lambda b: (0, 0, 0)),      # conv2 tap weights
                pl.BlockSpec((C, 1), lambda b: (0, 0)),            # conv2 bias
            ],
            out_specs=pl.BlockSpec((None, C, HW), lambda b: (b, 0, 0)),
            scratch_shapes=[pltpu.VMEM((C, L), jnp.float32)],
        ),
        compiler_params=pltpu.CompilerParams(dimension_semantics=("parallel",)),
    )(x_pad, w1_t, b1_c, w2_t, b2_c)

    return out.reshape(B, C, H, W)


def _reference(x, w1, b1, w2, b2):
    """Pure-JAX reference matching the PyTorch forward."""
    def conv(z, w, b):
        y = lax.conv_general_dilated(
            z, w, window_strides=(1, 1), padding=((2, 2), (2, 2)),
            rhs_dilation=(2, 2), dimension_numbers=("NCHW", "OIHW", "NCHW"),
            precision=lax.Precision.HIGHEST,
        )
        return y + b[None, :, None, None]

    def inorm(y):
        mean = y.mean(axis=(2, 3), keepdims=True)
        var = ((y - mean) ** 2).mean(axis=(2, 3), keepdims=True)
        return (y - mean) * lax.rsqrt(var + EPS)

    h = jnp.maximum(inorm(conv(x, w1, b1)), 0.0)
    return inorm(conv(h, w2, b2)) + x


if __name__ == "__main__":
    B, C, H, W = 2, 4, 16, 16
    key = jax.random.PRNGKey(0)
    kx, k1, kb1, k2, kb2 = jax.random.split(key, 5)
    x = jax.random.normal(kx, (B, C, H, W), jnp.float32)
    w1 = jax.random.normal(k1, (C, C, 3, 3), jnp.float32) * 0.1
    b1 = jax.random.normal(kb1, (C,), jnp.float32) * 0.1
    w2 = jax.random.normal(k2, (C, C, 3, 3), jnp.float32) * 0.1
    b2 = jax.random.normal(kb2, (C,), jnp.float32) * 0.1

    out = jax.jit(residual_block_forward)(x, w1, b1, w2, b2)
    out = jax.block_until_ready(out)

    ref = _reference(x, w1, b1, w2, b2)
    assert out.shape == (B, C, H, W)
    max_err = float(jnp.max(jnp.abs(out - ref)))
    assert jnp.allclose(out, ref, atol=2e-2, rtol=2e-2), f"max abs err {max_err}"
    print("KERNEL_OK")
</pallas_src>

<mosaic_0001>
module attributes {stable_mosaic.version = 11 : i64} {
  func.func @kernel(%arg0: i32, %arg1: memref<1x4x512xf32, #tpu.memory_space<vmem>>, %arg2: memref<9x4x4xf32, #tpu.memory_space<vmem>>, %arg3: memref<4x1xf32, #tpu.memory_space<vmem>>, %arg4: memref<9x4x4xf32, #tpu.memory_space<vmem>>, %arg5: memref<4x1xf32, #tpu.memory_space<vmem>>, %arg6: memref<1x4x256xf32, #tpu.memory_space<vmem>>, %arg7: memref<4x512xf32, #tpu.memory_space<vmem>>) attributes {dimension_semantics = [#tpu.dimension_semantics<parallel>], iteration_bounds = array<i64: 2>, scalar_prefetch = 0 : i64, scratch_operands = 1 : i64, tpu.core_type = #tpu.core_type<tc>, window_params = [{transform_indices = @transform_0, window_bounds = array<i64: 1, 4, 512>}, {pipeline_mode = #tpu.pipeline_mode<synchronous>, transform_indices = @transform_1, window_bounds = array<i64: 9, 4, 4>}, {pipeline_mode = #tpu.pipeline_mode<synchronous>, transform_indices = @transform_2, window_bounds = array<i64: 4, 1>}, {pipeline_mode = #tpu.pipeline_mode<synchronous>, transform_indices = @transform_3, window_bounds = array<i64: 9, 4, 4>}, {pipeline_mode = #tpu.pipeline_mode<synchronous>, transform_indices = @transform_4, window_bounds = array<i64: 4, 1>}, {transform_indices = @transform_5, window_bounds = array<i64: 1, 4, 256>}]} {
    %0 = tpu.iota {dimensions = array<i32: 1>} : vector<1x256xi32>
    %c16_i32 = arith.constant 16 : i32
    %c0_i32 = arith.constant 0 : i32
    %1 = arith.cmpi eq, %c16_i32, %c0_i32 : i32
    %c1_i32 = arith.constant 1 : i32
    %2 = arith.select %1, %c1_i32, %c16_i32 : i32
    %3 = vector.broadcast %2 : i32 to vector<1x256xi32>
    %4 = arith.remsi %0, %3 : vector<1x256xi32>
    %c0_i32_0 = arith.constant 0 : i32
    %5 = vector.broadcast %c0_i32_0 : i32 to vector<1x256xi32>
    %6 = arith.cmpi ne, %4, %5 : vector<1x256xi32>
    %c0_i32_1 = arith.constant 0 : i32
    %7 = vector.broadcast %c0_i32_1 : i32 to vector<1x256xi32>
    %8 = arith.cmpi slt, %4, %7 : vector<1x256xi32>
    %c0_i32_2 = arith.constant 0 : i32
    %9 = arith.cmpi slt, %2, %c0_i32_2 : i32
    %10 = vector.broadcast %9 : i1 to vector<1x256xi1>
    %11 = vector.broadcast %10 : vector<1x256xi1> to vector<1x256xi1>
    %12 = arith.xori %8, %11 : vector<1x256xi1>
    %13 = arith.andi %12, %6 : vector<1x256xi1>
    %14 = vector.broadcast %2 : i32 to vector<1x256xi32>
    %15 = arith.addi %4, %14 : vector<1x256xi32>
    %16 = arith.select %13, %15, %4 : vector<1x256xi1>, vector<1x256xi32>
    %c2_i32 = arith.constant 2 : i32
    %17 = vector.broadcast %c2_i32 : i32 to vector<1x256xi32>
    %18 = arith.cmpi sge, %16, %17 : vector<1x256xi32>
    %c14_i32 = arith.constant 14 : i32
    %19 = vector.broadcast %c14_i32 : i32 to vector<1x256xi32>
    %20 = arith.cmpi slt, %16, %19 : vector<1x256xi32>
    %cst = arith.constant 0.000000e+00 : f32
    %21 = vector.broadcast %cst : f32 to vector<4x256xf32>
    %c0 = arith.constant 0 : index
    %c0_3 = arith.constant 0 : index
    %c94 = arith.constant 94 : index
    %22 = vector.load %arg1[%c0, %c0_3, %c94] : memref<1x4x512xf32, #tpu.memory_space<vmem>>, vector<1x4x256xf32>
    %23 = vector.shape_cast %22 : vector<1x4x256xf32> to vector<4x256xf32>
    %cst_4 = arith.constant 0.000000e+00 : f32
    %24 = vector.shape_cast %18 : vector<1x256xi1> to vector<1x256xi1>
    %25 = vector.broadcast %24 : vector<1x256xi1> to vector<4x256xi1>
    %26 = vector.broadcast %cst_4 : f32 to vector<4x256xf32>
    %27 = arith.select %25, %23, %26 : vector<4x256xi1>, vector<4x256xf32>
    %c0_5 = arith.constant 0 : index
    %c0_6 = arith.constant 0 : index
    %c0_7 = arith.constant 0 : index
    %28 = vector.load %arg2[%c0_5, %c0_6, %c0_7] : memref<9x4x4xf32, #tpu.memory_space<vmem>>, vector<1x4x4xf32>
    %29 = vector.shape_cast %28 : vector<1x4x4xf32> to vector<4x4xf32>
    %cst_8 = arith.constant dense<0.000000e+00> : vector<4x256xf32>
    %30 = tpu.matmul %29, %27, %cst_8 {dimension_numbers = #tpu.dot_dimension_numbers<[1], [0], [0], [1], [0, 0, 1, 1], [], []>} : vector<4x4xf32>, vector<4x256xf32>, vector<4x256xf32> -> vector<4x256xf32>
    %31 = arith.addf %21, %30 : vector<4x256xf32>
    %c0_9 = arith.constant 0 : index
    %c0_10 = arith.constant 0 : index
    %c96 = arith.constant 96 : index
    %32 = vector.load %arg1[%c0_9, %c0_10, %c96] : memref<1x4x512xf32, #tpu.memory_space<vmem>>, vector<1x4x256xf32>
    %33 = vector.shape_cast %32 : vector<1x4x256xf32> to vector<4x256xf32>
    %c1 = arith.constant 1 : index
    %c0_11 = arith.constant 0 : index
    %c0_12 = arith.constant 0 : index
    %34 = vector.load %arg2[%c1, %c0_11, %c0_12] : memref<9x4x4xf32, #tpu.memory_space<vmem>>, vector<1x4x4xf32>
    %35 = vector.shape_cast %34 : vector<1x4x4xf32> to vector<4x4xf32>
    %cst_13 = arith.constant dense<0.000000e+00> : vector<4x256xf32>
    %36 = tpu.matmul %35, %33, %cst_13 {dimension_numbers = #tpu.dot_dimension_numbers<[1], [0], [0], [1], [0, 0, 1, 1], [], []>} : vector<4x4xf32>, vector<4x256xf32>, vector<4x256xf32> -> vector<4x256xf32>
    %37 = arith.addf %31, %36 : vector<4x256xf32>
    %c0_14 = arith.constant 0 : index
    %c0_15 = arith.constant 0 : index
    %c98 = arith.constant 98 : index
    %38 = vector.load %arg1[%c0_14, %c0_15, %c98] : memref<1x4x512xf32, #tpu.memory_space<vmem>>, vector<1x4x256xf32>
    %39 = vector.shape_cast %38 : vector<1x4x256xf32> to vector<4x256xf32>
    %cst_16 = arith.constant 0.000000e+00 : f32
    %40 = vector.shape_cast %20 : vector<1x256xi1> to vector<1x256xi1>
    %41 = vector.broadcast %40 : vector<1x256xi1> to vector<4x256xi1>
    %42 = vector.broadcast %cst_16 : f32 to vector<4x256xf32>
    %43 = arith.select %41, %39, %42 : vector<4x256xi1>, vector<4x256xf32>
    %c2 = arith.constant 2 : index
    %c0_17 = arith.constant 0 : index
    %c0_18 = arith.constant 0 : index
    %44 = vector.load %arg2[%c2, %c0_17, %c0_18] : memref<9x4x4xf32, #tpu.memory_space<vmem>>, vector<1x4x4xf32>
    %45 = vector.shape_cast %44 : vector<1x4x4xf32> to vector<4x4xf32>
    %cst_19 = arith.constant dense<0.000000e+00> : vector<4x256xf32>
    %46 = tpu.matmul %45, %43, %cst_19 {dimension_numbers = #tpu.dot_dimension_numbers<[1], [0], [0], [1], [0, 0, 1, 1], [], []>} : vector<4x4xf32>, vector<4x256xf32>, vector<4x256xf32> -> vector<4x256xf32>
    %47 = arith.addf %37, %46 : vector<4x256xf32>
    %c0_20 = arith.constant 0 : index
    %c0_21 = arith.constant 0 : index
    %c126 = arith.constant 126 : index
    %48 = vector.load %arg1[%c0_20, %c0_21, %c126] : memref<1x4x512xf32, #tpu.memory_space<vmem>>, vector<1x4x256xf32>
    %49 = vector.shape_cast %48 : vector<1x4x256xf32> to vector<4x256xf32>
    %cst_22 = arith.constant 0.000000e+00 : f32
    %50 = vector.shape_cast %18 : vector<1x256xi1> to vector<1x256xi1>
    %51 = vector.broadcast %50 : vector<1x256xi1> to vector<4x256xi1>
    %52 = vector.broadcast %cst_22 : f32 to vector<4x256xf32>
    %53 = arith.select %51, %49, %52 : vector<4x256xi1>, vector<4x256xf32>
    %c3 = arith.constant 3 : index
    %c0_23 = arith.constant 0 : index
    %c0_24 = arith.constant 0 : index
    %54 = vector.load %arg2[%c3, %c0_23, %c0_24] : memref<9x4x4xf32, #tpu.memory_space<vmem>>, vector<1x4x4xf32>
    %55 = vector.shape_cast %54 : vector<1x4x4xf32> to vector<4x4xf32>
    %cst_25 = arith.constant dense<0.000000e+00> : vector<4x256xf32>
    %56 = tpu.matmul %55, %53, %cst_25 {dimension_numbers = #tpu.dot_dimension_numbers<[1], [0], [0], [1], [0, 0, 1, 1], [], []>} : vector<4x4xf32>, vector<4x256xf32>, vector<4x256xf32> -> vector<4x256xf32>
    %57 = arith.addf %47, %56 : vector<4x256xf32>
    %c0_26 = arith.constant 0 : index
    %c0_27 = arith.constant 0 : index
    %c128 = arith.constant 128 : index
    %58 = vector.load %arg1[%c0_26, %c0_27, %c128] : memref<1x4x512xf32, #tpu.memory_space<vmem>>, vector<1x4x256xf32>
    %59 = vector.shape_cast %58 : vector<1x4x256xf32> to vector<4x256xf32>
    %c4 = arith.constant 4 : index
    %c0_28 = arith.constant 0 : index
    %c0_29 = arith.constant 0 : index
    %60 = vector.load %arg2[%c4, %c0_28, %c0_29] : memref<9x4x4xf32, #tpu.memory_space<vmem>>, vector<1x4x4xf32>
    %61 = vector.shape_cast %60 : vector<1x4x4xf32> to vector<4x4xf32>
    %cst_30 = arith.constant dense<0.000000e+00> : vector<4x256xf32>
    %62 = tpu.matmul %61, %59, %cst_30 {dimension_numbers = #tpu.dot_dimension_numbers<[1], [0], [0], [1], [0, 0, 1, 1], [], []>} : vector<4x4xf32>, vector<4x256xf32>, vector<4x256xf32> -> vector<4x256xf32>
    %63 = arith.addf %57, %62 : vector<4x256xf32>
    %c0_31 = arith.constant 0 : index
    %c0_32 = arith.constant 0 : index
    %c130 = arith.constant 130 : index
    %64 = vector.load %arg1[%c0_31, %c0_32, %c130] : memref<1x4x512xf32, #tpu.memory_space<vmem>>, vector<1x4x256xf32>
    %65 = vector.shape_cast %64 : vector<1x4x256xf32> to vector<4x256xf32>
    %cst_33 = arith.constant 0.000000e+00 : f32
    %66 = vector.shape_cast %20 : vector<1x256xi1> to vector<1x256xi1>
    %67 = vector.broadcast %66 : vector<1x256xi1> to vector<4x256xi1>
    %68 = vector.broadcast %cst_33 : f32 to vector<4x256xf32>
    %69 = arith.select %67, %65, %68 : vector<4x256xi1>, vector<4x256xf32>
    %c5 = arith.constant 5 : index
    %c0_34 = arith.constant 0 : index
    %c0_35 = arith.constant 0 : index
    %70 = vector.load %arg2[%c5, %c0_34, %c0_35] : memref<9x4x4xf32, #tpu.memory_space<vmem>>, vector<1x4x4xf32>
    %71 = vector.shape_cast %70 : vector<1x4x4xf32> to vector<4x4xf32>
    %cst_36 = arith.constant dense<0.000000e+00> : vector<4x256xf32>
    %72 = tpu.matmul %71, %69, %cst_36 {dimension_numbers = #tpu.dot_dimension_numbers<[1], [0], [0], [1], [0, 0, 1, 1], [], []>} : vector<4x4xf32>, vector<4x256xf32>, vector<4x256xf32> -> vector<4x256xf32>
    %73 = arith.addf %63, %72 : vector<4x256xf32>
    %c0_37 = arith.constant 0 : index
    %c0_38 = arith.constant 0 : index
    %c158 = arith.constant 158 : index
    %74 = vector.load %arg1[%c0_37, %c0_38, %c158] : memref<1x4x512xf32, #tpu.memory_space<vmem>>, vector<1x4x256xf32>
    %75 = vector.shape_cast %74 : vector<1x4x256xf32> to vector<4x256xf32>
    %cst_39 = arith.constant 0.000000e+00 : f32
    %76 = vector.shape_cast %18 : vector<1x256xi1> to vector<1x256xi1>
    %77 = vector.broadcast %76 : vector<1x256xi1> to vector<4x256xi1>
    %78 = vector.broadcast %cst_39 : f32 to vector<4x256xf32>
    %79 = arith.select %77, %75, %78 : vector<4x256xi1>, vector<4x256xf32>
    %c6 = arith.constant 6 : index
    %c0_40 = arith.constant 0 : index
    %c0_41 = arith.constant 0 : index
    %80 = vector.load %arg2[%c6, %c0_40, %c0_41] : memref<9x4x4xf32, #tpu.memory_space<vmem>>, vector<1x4x4xf32>
    %81 = vector.shape_cast %80 : vector<1x4x4xf32> to vector<4x4xf32>
    %cst_42 = arith.constant dense<0.000000e+00> : vector<4x256xf32>
    %82 = tpu.matmul %81, %79, %cst_42 {dimension_numbers = #tpu.dot_dimension_numbers<[1], [0], [0], [1], [0, 0, 1, 1], [], []>} : vector<4x4xf32>, vector<4x256xf32>, vector<4x256xf32> -> vector<4x256xf32>
    %83 = arith.addf %73, %82 : vector<4x256xf32>
    %c0_43 = arith.constant 0 : index
    %c0_44 = arith.constant 0 : index
    %c160 = arith.constant 160 : index
    %84 = vector.load %arg1[%c0_43, %c0_44, %c160] : memref<1x4x512xf32, #tpu.memory_space<vmem>>, vector<1x4x256xf32>
    %85 = vector.shape_cast %84 : vector<1x4x256xf32> to vector<4x256xf32>
    %c7 = arith.constant 7 : index
    %c0_45 = arith.constant 0 : index
    %c0_46 = arith.constant 0 : index
    %86 = vector.load %arg2[%c7, %c0_45, %c0_46] : memref<9x4x4xf32, #tpu.memory_space<vmem>>, vector<1x4x4xf32>
    %87 = vector.shape_cast %86 : vector<1x4x4xf32> to vector<4x4xf32>
    %cst_47 = arith.constant dense<0.000000e+00> : vector<4x256xf32>
    %88 = tpu.matmul %87, %85, %cst_47 {dimension_numbers = #tpu.dot_dimension_numbers<[1], [0], [0], [1], [0, 0, 1, 1], [], []>} : vector<4x4xf32>, vector<4x256xf32>, vector<4x256xf32> -> vector<4x256xf32>
    %89 = arith.addf %83, %88 : vector<4x256xf32>
    %c0_48 = arith.constant 0 : index
    %c0_49 = arith.constant 0 : index
    %c162 = arith.constant 162 : index
    %90 = vector.load %arg1[%c0_48, %c0_49, %c162] : memref<1x4x512xf32, #tpu.memory_space<vmem>>, vector<1x4x256xf32>
    %91 = vector.shape_cast %90 : vector<1x4x256xf32> to vector<4x256xf32>
    %cst_50 = arith.constant 0.000000e+00 : f32
    %92 = vector.shape_cast %20 : vector<1x256xi1> to vector<1x256xi1>
    %93 = vector.broadcast %92 : vector<1x256xi1> to vector<4x256xi1>
    %94 = vector.broadcast %cst_50 : f32 to vector<4x256xf32>
    %95 = arith.select %93, %91, %94 : vector<4x256xi1>, vector<4x256xf32>
    %c8 = arith.constant 8 : index
    %c0_51 = arith.constant 0 : index
    %c0_52 = arith.constant 0 : index
    %96 = vector.load %arg2[%c8, %c0_51, %c0_52] : memref<9x4x4xf32, #tpu.memory_space<vmem>>, vector<1x4x4xf32>
    %97 = vector.shape_cast %96 : vector<1x4x4xf32> to vector<4x4xf32>
    %cst_53 = arith.constant dense<0.000000e+00> : vector<4x256xf32>
    %98 = tpu.matmul %97, %95, %cst_53 {dimension_numbers = #tpu.dot_dimension_numbers<[1], [0], [0], [1], [0, 0, 1, 1], [], []>} : vector<4x4xf32>, vector<4x256xf32>, vector<4x256xf32> -> vector<4x256xf32>
    %99 = arith.addf %89, %98 : vector<4x256xf32>
    %c0_54 = arith.constant 0 : index
    %c0_55 = arith.constant 0 : index
    %100 = vector.load %arg3[%c0_54, %c0_55] : memref<4x1xf32, #tpu.memory_space<vmem>>, vector<4x1xf32>
    %101 = vector.broadcast %100 : vector<4x1xf32> to vector<4x256xf32>
    %102 = arith.addf %99, %101 : vector<4x256xf32>
    %cst_56 = arith.constant dense<0.000000e+00> : vector<4xf32>
    %103 = vector.multi_reduction <add>, %102, %cst_56 [1] : vector<4x256xf32> to vector<4xf32>
    %104 = vector.shape_cast %103 : vector<4xf32> to vector<4x1xf32>
    %cst_57 = arith.constant 2.560000e+02 : f32
    %105 = vector.broadcast %cst_57 : f32 to vector<4x1xf32>
    %106 = arith.divf %104, %105 : vector<4x1xf32>
    %107 = vector.broadcast %106 : vector<4x1xf32> to vector<4x256xf32>
    %108 = arith.subf %102, %107 : vector<4x256xf32>
    %109 = arith.mulf %108, %108 : vector<4x256xf32>
    %cst_58 = arith.constant dense<0.000000e+00> : vector<4xf32>
    %110 = vector.multi_reduction <add>, %109, %cst_58 [1] : vector<4x256xf32> to vector<4xf32>
    %111 = vector.shape_cast %110 : vector<4xf32> to vector<4x1xf32>
    %cst_59 = arith.constant 2.560000e+02 : f32
    %112 = vector.broadcast %cst_59 : f32 to vector<4x1xf32>
    %113 = arith.divf %111, %112 : vector<4x1xf32>
    %114 = vector.broadcast %106 : vector<4x1xf32> to vector<4x256xf32>
    %115 = arith.subf %102, %114 : vector<4x256xf32>
    %cst_60 = arith.constant 9.99999974E-6 : f32
    %116 = vector.broadcast %cst_60 : f32 to vector<4x1xf32>
    %117 = arith.addf %113, %116 : vector<4x1xf32>
    %118 = math.rsqrt %117 : vector<4x1xf32>
    %119 = vector.broadcast %118 : vector<4x1xf32> to vector<4x256xf32>
    %120 = arith.mulf %115, %119 : vector<4x256xf32>
    %cst_61 = arith.constant 0.000000e+00 : f32
    %121 = vector.broadcast %cst_61 : f32 to vector<4x256xf32>
    %122 = arith.maximumf %120, %121 : vector<4x256xf32>
    %cst_62 = arith.constant 0.000000e+00 : f32
    %123 = vector.broadcast %cst_62 : f32 to vector<4x128xf32>
    %c0_63 = arith.constant 0 : index
    %c0_64 = arith.constant 0 : index
    %124 = vector.load %arg7[%c0_63, %c0_64] : memref<4x512xf32, #tpu.memory_space<vmem>>, vector<4x128xf32>
    tpu.vector_store %arg7[%c0_63, %c0_64], %123 {strides = array<i32>} : memref<4x512xf32, #tpu.memory_space<vmem>>, vector<4x128xf32>,
    %cst_65 = arith.constant 0.000000e+00 : f32
    %125 = vector.broadcast %cst_65 : f32 to vector<4x128xf32>
    %c0_66 = arith.constant 0 : index
    %c384 = arith.constant 384 : index
    %126 = vector.load %arg7[%c0_66, %c384] : memref<4x512xf32, #tpu.memory_space<vmem>>, vector<4x128xf32>
    tpu.vector_store %arg7[%c0_66, %c384], %125 {strides = array<i32>} : memref<4x512xf32, #tpu.memory_space<vmem>>, vector<4x128xf32>,
    %c0_67 = arith.constant 0 : index
    %c128_68 = arith.constant 128 : index
    %127 = vector.load %arg7[%c0_67, %c128_68] : memref<4x512xf32, #tpu.memory_space<vmem>>, vector<4x256xf32>
    tpu.vector_store %arg7[%c0_67, %c128_68], %122 {strides = array<i32>} : memref<4x512xf32, #tpu.memory_space<vmem>>, vector<4x256xf32>,
    %cst_69 = arith.constant 0.000000e+00 : f32
    %128 = vector.broadcast %cst_69 : f32 to vector<4x256xf32>
    %c0_70 = arith.constant 0 : index
    %c94_71 = arith.constant 94 : index
    %129 = vector.load %arg7[%c0_70, %c94_71] : memref<4x512xf32, #tpu.memory_space<vmem>>, vector<4x256xf32>
    %cst_72 = arith.constant 0.000000e+00 : f32
    %130 = vector.shape_cast %18 : vector<1x256xi1> to vector<1x256xi1>
    %131 = vector.broadcast %130 : vector<1x256xi1> to vector<4x256xi1>
    %132 = vector.broadcast %cst_72 : f32 to vector<4x256xf32>
    %133 = arith.select %131, %129, %132 : vector<4x256xi1>, vector<4x256xf32>
    %c0_73 = arith.constant 0 : index
    %c0_74 = arith.constant 0 : index
    %c0_75 = arith.constant 0 : index
    %134 = vector.load %arg4[%c0_73, %c0_74, %c0_75] : memref<9x4x4xf32, #tpu.memory_space<vmem>>, vector<1x4x4xf32>
    %135 = vector.shape_cast %134 : vector<1x4x4xf32> to vector<4x4xf32>
    %cst_76 = arith.constant dense<0.000000e+00> : vector<4x256xf32>
    %136 = tpu.matmul %135, %133, %cst_76 {dimension_numbers = #tpu.dot_dimension_numbers<[1], [0], [0], [1], [0, 0, 1, 1], [], []>} : vector<4x4xf32>, vector<4x256xf32>, vector<4x256xf32> -> vector<4x256xf32>
    %137 = arith.addf %128, %136 : vector<4x256xf32>
    %c0_77 = arith.constant 0 : index
    %c96_78 = arith.constant 96 : index
    %138 = vector.load %arg7[%c0_77, %c96_78] : memref<4x512xf32, #tpu.memory_space<vmem>>, vector<4x256xf32>
    %c1_79 = arith.constant 1 : index
    %c0_80 = arith.constant 0 : index
    %c0_81 = arith.constant 0 : index
    %139 = vector.load %arg4[%c1_79, %c0_80, %c0_81] : memref<9x4x4xf32, #tpu.memory_space<vmem>>, vector<1x4x4xf32>
    %140 = vector.shape_cast %139 : vector<1x4x4xf32> to vector<4x4xf32>
    %cst_82 = arith.constant dense<0.000000e+00> : vector<4x256xf32>
    %141 = tpu.matmul %140, %138, %cst_82 {dimension_numbers = #tpu.dot_dimension_numbers<[1], [0], [0], [1], [0, 0, 1, 1], [], []>} : vector<4x4xf32>, vector<4x256xf32>, vector<4x256xf32> -> vector<4x256xf32>
    %142 = arith.addf %137, %141 : vector<4x256xf32>
    %c0_83 = arith.constant 0 : index
    %c98_84 = arith.constant 98 : index
    %143 = vector.load %arg7[%c0_83, %c98_84] : memref<4x512xf32, #tpu.memory_space<vmem>>, vector<4x256xf32>
    %cst_85 = arith.constant 0.000000e+00 : f32
    %144 = vector.shape_cast %20 : vector<1x256xi1> to vector<1x256xi1>
    %145 = vector.broadcast %144 : vector<1x256xi1> to vector<4x256xi1>
    %146 = vector.broadcast %cst_85 : f32 to vector<4x256xf32>
    %147 = arith.select %145, %143, %146 : vector<4x256xi1>, vector<4x256xf32>
    %c2_86 = arith.constant 2 : index
    %c0_87 = arith.constant 0 : index
    %c0_88 = arith.constant 0 : index
    %148 = vector.load %arg4[%c2_86, %c0_87, %c0_88] : memref<9x4x4xf32, #tpu.memory_space<vmem>>, vector<1x4x4xf32>
    %149 = vector.shape_cast %148 : vector<1x4x4xf32> to vector<4x4xf32>
    %cst_89 = arith.constant dense<0.000000e+00> : vector<4x256xf32>
    %150 = tpu.matmul %149, %147, %cst_89 {dimension_numbers = #tpu.dot_dimension_numbers<[1], [0], [0], [1], [0, 0, 1, 1], [], []>} : vector<4x4xf32>, vector<4x256xf32>, vector<4x256xf32> -> vector<4x256xf32>
    %151 = arith.addf %142, %150 : vector<4x256xf32>
    %c0_90 = arith.constant 0 : index
    %c126_91 = arith.constant 126 : index
    %152 = vector.load %arg7[%c0_90, %c126_91] : memref<4x512xf32, #tpu.memory_space<vmem>>, vector<4x256xf32>
    %cst_92 = arith.constant 0.000000e+00 : f32
    %153 = vector.shape_cast %18 : vector<1x256xi1> to vector<1x256xi1>
    %154 = vector.broadcast %153 : vector<1x256xi1> to vector<4x256xi1>
    %155 = vector.broadcast %cst_92 : f32 to vector<4x256xf32>
    %156 = arith.select %154, %152, %155 : vector<4x256xi1>, vector<4x256xf32>
    %c3_93 = arith.constant 3 : index
    %c0_94 = arith.constant 0 : index
    %c0_95 = arith.constant 0 : index
    %157 = vector.load %arg4[%c3_93, %c0_94, %c0_95] : memref<9x4x4xf32, #tpu.memory_space<vmem>>, vector<1x4x4xf32>
    %158 = vector.shape_cast %157 : vector<1x4x4xf32> to vector<4x4xf32>
    %cst_96 = arith.constant dense<0.000000e+00> : vector<4x256xf32>
    %159 = tpu.matmul %158, %156, %cst_96 {dimension_numbers = #tpu.dot_dimension_numbers<[1], [0], [0], [1], [0, 0, 1, 1], [], []>} : vector<4x4xf32>, vector<4x256xf32>, vector<4x256xf32> -> vector<4x256xf32>
    %160 = arith.addf %151, %159 : vector<4x256xf32>
    %c0_97 = arith.constant 0 : index
    %c128_98 = arith.constant 128 : index
    %161 = vector.load %arg7[%c0_97, %c128_98] : memref<4x512xf32, #tpu.memory_space<vmem>>, vector<4x256xf32>
    %c4_99 = arith.constant 4 : index
    %c0_100 = arith.constant 0 : index
    %c0_101 = arith.constant 0 : index
    %162 = vector.load %arg4[%c4_99, %c0_100, %c0_101] : memref<9x4x4xf32, #tpu.memory_space<vmem>>, vector<1x4x4xf32>
    %163 = vector.shape_cast %162 : vector<1x4x4xf32> to vector<4x4xf32>
    %cst_102 = arith.constant dense<0.000000e+00> : vector<4x256xf32>
    %164 = tpu.matmul %163, %161, %cst_102 {dimension_numbers = #tpu.dot_dimension_numbers<[1], [0], [0], [1], [0, 0, 1, 1], [], []>} : vector<4x4xf32>, vector<4x256xf32>, vector<4x256xf32> -> vector<4x256xf32>
    %165 = arith.addf %160, %164 : vector<4x256xf32>
    %c0_103 = arith.constant 0 : index
    %c130_104 = arith.constant 130 : index
    %166 = vector.load %arg7[%c0_103, %c130_104] : memref<4x512xf32, #tpu.memory_space<vmem>>, vector<4x256xf32>
    %cst_105 = arith.constant 0.000000e+00 : f32
    %167 = vector.shape_cast %20 : vector<1x256xi1> to vector<1x256xi1>
    %168 = vector.broadcast %167 : vector<1x256xi1> to vector<4x256xi1>
    %169 = vector.broadcast %cst_105 : f32 to vector<4x256xf32>
    %170 = arith.select %168, %166, %169 : vector<4x256xi1>, vector<4x256xf32>
    %c5_106 = arith.constant 5 : index
    %c0_107 = arith.constant 0 : index
    %c0_108 = arith.constant 0 : index
    %171 = vector.load %arg4[%c5_106, %c0_107, %c0_108] : memref<9x4x4xf32, #tpu.memory_space<vmem>>, vector<1x4x4xf32>
    %172 = vector.shape_cast %171 : vector<1x4x4xf32> to vector<4x4xf32>
    %cst_109 = arith.constant dense<0.000000e+00> : vector<4x256xf32>
    %173 = tpu.matmul %172, %170, %cst_109 {dimension_numbers = #tpu.dot_dimension_numbers<[1], [0], [0], [1], [0, 0, 1, 1], [], []>} : vector<4x4xf32>, vector<4x256xf32>, vector<4x256xf32> -> vector<4x256xf32>
    %174 = arith.addf %165, %173 : vector<4x256xf32>
    %c0_110 = arith.constant 0 : index
    %c158_111 = arith.constant 158 : index
    %175 = vector.load %arg7[%c0_110, %c158_111] : memref<4x512xf32, #tpu.memory_space<vmem>>, vector<4x256xf32>
    %cst_112 = arith.constant 0.000000e+00 : f32
    %176 = vector.shape_cast %18 : vector<1x256xi1> to vector<1x256xi1>
    %177 = vector.broadcast %176 : vector<1x256xi1> to vector<4x256xi1>
    %178 = vector.broadcast %cst_112 : f32 to vector<4x256xf32>
    %179 = arith.select %177, %175, %178 : vector<4x256xi1>, vector<4x256xf32>
    %c6_113 = arith.constant 6 : index
    %c0_114 = arith.constant 0 : index
    %c0_115 = arith.constant 0 : index
    %180 = vector.load %arg4[%c6_113, %c0_114, %c0_115] : memref<9x4x4xf32, #tpu.memory_space<vmem>>, vector<1x4x4xf32>
    %181 = vector.shape_cast %180 : vector<1x4x4xf32> to vector<4x4xf32>
    %cst_116 = arith.constant dense<0.000000e+00> : vector<4x256xf32>
    %182 = tpu.matmul %181, %179, %cst_116 {dimension_numbers = #tpu.dot_dimension_numbers<[1], [0], [0], [1], [0, 0, 1, 1], [], []>} : vector<4x4xf32>, vector<4x256xf32>, vector<4x256xf32> -> vector<4x256xf32>
    %183 = arith.addf %174, %182 : vector<4x256xf32>
    %c0_117 = arith.constant 0 : index
    %c160_118 = arith.constant 160 : index
    %184 = vector.load %arg7[%c0_117, %c160_118] : memref<4x512xf32, #tpu.memory_space<vmem>>, vector<4x256xf32>
    %c7_119 = arith.constant 7 : index
    %c0_120 = arith.constant 0 : index
    %c0_121 = arith.constant 0 : index
    %185 = vector.load %arg4[%c7_119, %c0_120, %c0_121] : memref<9x4x4xf32, #tpu.memory_space<vmem>>, vector<1x4x4xf32>
    %186 = vector.shape_cast %185 : vector<1x4x4xf32> to vector<4x4xf32>
    %cst_122 = arith.constant dense<0.000000e+00> : vector<4x256xf32>
    %187 = tpu.matmul %186, %184, %cst_122 {dimension_numbers = #tpu.dot_dimension_numbers<[1], [0], [0], [1], [0, 0, 1, 1], [], []>} : vector<4x4xf32>, vector<4x256xf32>, vector<4x256xf32> -> vector<4x256xf32>
    %188 = arith.addf %183, %187 : vector<4x256xf32>
    %c0_123 = arith.constant 0 : index
    %c162_124 = arith.constant 162 : index
    %189 = vector.load %arg7[%c0_123, %c162_124] : memref<4x512xf32, #tpu.memory_space<vmem>>, vector<4x256xf32>
    %cst_125 = arith.constant 0.000000e+00 : f32
    %190 = vector.shape_cast %20 : vector<1x256xi1> to vector<1x256xi1>
    %191 = vector.broadcast %190 : vector<1x256xi1> to vector<4x256xi1>
    %192 = vector.broadcast %cst_125 : f32 to vector<4x256xf32>
    %193 = arith.select %191, %189, %192 : vector<4x256xi1>, vector<4x256xf32>
    %c8_126 = arith.constant 8 : index
    %c0_127 = arith.constant 0 : index
    %c0_128 = arith.constant 0 : index
    %194 = vector.load %arg4[%c8_126, %c0_127, %c0_128] : memref<9x4x4xf32, #tpu.memory_space<vmem>>, vector<1x4x4xf32>
    %195 = vector.shape_cast %194 : vector<1x4x4xf32> to vector<4x4xf32>
    %cst_129 = arith.constant dense<0.000000e+00> : vector<4x256xf32>
    %196 = tpu.matmul %195, %193, %cst_129 {dimension_numbers = #tpu.dot_dimension_numbers<[1], [0], [0], [1], [0, 0, 1, 1], [], []>} : vector<4x4xf32>, vector<4x256xf32>, vector<4x256xf32> -> vector<4x256xf32>
    %197 = arith.addf %188, %196 : vector<4x256xf32>
    %c0_130 = arith.constant 0 : index
    %c0_131 = arith.constant 0 : index
    %198 = vector.load %arg5[%c0_130, %c0_131] : memref<4x1xf32, #tpu.memory_space<vmem>>, vector<4x1xf32>
    %199 = vector.broadcast %198 : vector<4x1xf32> to vector<4x256xf32>
    %200 = arith.addf %197, %199 : vector<4x256xf32>
    %cst_132 = arith.constant dense<0.000000e+00> : vector<4xf32>
    %201 = vector.multi_reduction <add>, %200, %cst_132 [1] : vector<4x256xf32> to vector<4xf32>
    %202 = vector.shape_cast %201 : vector<4xf32> to vector<4x1xf32>
    %cst_133 = arith.constant 2.560000e+02 : f32
    %203 = vector.broadcast %cst_133 : f32 to vector<4x1xf32>
    %204 = arith.divf %202, %203 : vector<4x1xf32>
    %205 = vector.broadcast %204 : vector<4x1xf32> to vector<4x256xf32>
    %206 = arith.subf %200, %205 : vector<4x256xf32>
    %207 = arith.mulf %206, %206 : vector<4x256xf32>
    %cst_134 = arith.constant dense<0.000000e+00> : vector<4xf32>
    %208 = vector.multi_reduction <add>, %207, %cst_134 [1] : vector<4x256xf32> to vector<4xf32>
    %209 = vector.shape_cast %208 : vector<4xf32> to vector<4x1xf32>
    %cst_135 = arith.constant 2.560000e+02 : f32
    %210 = vector.broadcast %cst_135 : f32 to vector<4x1xf32>
    %211 = arith.divf %209, %210 : vector<4x1xf32>
    %212 = vector.broadcast %204 : vector<4x1xf32> to vector<4x256xf32>
    %213 = arith.subf %200, %212 : vector<4x256xf32>
    %cst_136 = arith.constant 9.99999974E-6 : f32
    %214 = vector.broadcast %cst_136 : f32 to vector<4x1xf32>
    %215 = arith.addf %211, %214 : vector<4x1xf32>
    %216 = math.rsqrt %215 : vector<4x1xf32>
    %217 = vector.broadcast %216 : vector<4x1xf32> to vector<4x256xf32>
    %218 = arith.mulf %213, %217 : vector<4x256xf32>
    %c0_137 = arith.constant 0 : index
    %c0_138 = arith.constant 0 : index
    %c128_139 = arith.constant 128 : index
    %219 = vector.load %arg1[%c0_137, %c0_138, %c128_139] : memref<1x4x512xf32, #tpu.memory_space<vmem>>, vector<1x4x256xf32>
    %220 = vector.shape_cast %219 : vector<1x4x256xf32> to vector<4x256xf32>
    %221 = arith.addf %218, %220 : vector<4x256xf32>
    %c0_140 = arith.constant 0 : index
    %c0_141 = arith.constant 0 : index
    %c0_142 = arith.constant 0 : index
    %222 = vector.load %arg6[%c0_140, %c0_141, %c0_142] : memref<1x4x256xf32, #tpu.memory_space<vmem>>, vector<1x4x256xf32>
    %223 = vector.shape_cast %222 : vector<1x4x256xf32> to vector<4x256xf32>
    %224 = vector.shape_cast %221 : vector<4x256xf32> to vector<1x4x256xf32>
    tpu.vector_store %arg6[%c0_140, %c0_141, %c0_142], %224 {strides = array<i32>} : memref<1x4x256xf32, #tpu.memory_space<vmem>>, vector<1x4x256xf32>,
    return
  }
  func.func @transform_0(%arg0: i32) -> (i32, i32, i32) {
    %c0_i32 = arith.constant 0 : i32
    %c0_i32_0 = arith.constant 0 : i32
    %c0_i32_1 = arith.constant 0 : i32
    return %arg0, %c0_i32, %c0_i32_0 : i32, i32, i32
  }
  func.func @transform_1(%arg0: i32) -> (i32, i32, i32) {
    %c0_i32 = arith.constant 0 : i32
    %c0_i32_0 = arith.constant 0 : i32
    %c0_i32_1 = arith.constant 0 : i32
    %c0_i32_2 = arith.constant 0 : i32
    return %c0_i32, %c0_i32_0, %c0_i32_1 : i32, i32, i32
  }
  func.func @transform_2(%arg0: i32) -> (i32, i32) {
    %c0_i32 = arith.constant 0 : i32
    %c0_i32_0 = arith.constant 0 : i32
    %c0_i32_1 = arith.constant 0 : i32
    return %c0_i32, %c0_i32_0 : i32, i32
  }
  func.func @transform_3(%arg0: i32) -> (i32, i32, i32) {
    %c0_i32 = arith.constant 0 : i32
    %c0_i32_0 = arith.constant 0 : i32
    %c0_i32_1 = arith.constant 0 : i32
    %c0_i32_2 = arith.constant 0 : i32
    return %c0_i32, %c0_i32_0, %c0_i32_1 : i32, i32, i32
  }
  func.func @transform_4(%arg0: i32) -> (i32, i32) {
    %c0_i32 = arith.constant 0 : i32
    %c0_i32_0 = arith.constant 0 : i32
    %c0_i32_1 = arith.constant 0 : i32
    return %c0_i32, %c0_i32_0 : i32, i32
  }
  func.func @transform_5(%arg0: i32) -> (i32, i32, i32) {
    %c0_i32 = arith.constant 0 : i32
    %c0_i32_0 = arith.constant 0 : i32
    %c0_i32_1 = arith.constant 0 : i32
    return %arg0, %c0_i32, %c0_i32_0 : i32, i32, i32
  }
}

</mosaic_0001>

<llo_original>
// kernel: residual_block_forward.1
$region0: #{residual_block_forward.1}
  #allocation0 [shape = 'u32[]', space=smem, size = 0x4, offset = 0x4, fixed_abs, tag = 'smem constant byte address 0x4 - core index']
  #allocation1 [shape = 'u32[72,128]{1,0:T(1,128)}', space=vmem, size = 0x9000, scoped, tag = 'internal scratch']
  #allocation2 [shape = 'f32[4,512]{1,0:T(4,128)}', space=vmem, size = 0x2000, scoped, tag = 'scratch operand']
  %s0 = inlined_call_operand.vmem [shape: f32[2,4,512], index: 0, kind: input, shape index: {}]
  %s1 = inlined_call_operand.vmem [shape: f32[9,4,4], index: 1, kind: input, shape index: {}]
  %s2 = inlined_call_operand.vmem [shape: f32[4,1], index: 2, kind: input, shape index: {}]
  %s3 = inlined_call_operand.vmem [shape: f32[9,4,4], index: 3, kind: input, shape index: {}]
  %s4 = inlined_call_operand.vmem [shape: f32[4,1], index: 4, kind: input, shape index: {}]
  %s5 = inlined_call_operand.vmem [shape: f32[2,4,256], index: 5, kind: output, shape index: {}]
  %s6 = sld [smem:[#allocation0]]
  $region53: #{residual_block_forward.1} parent=0
    _
  %s8 = ssub.s32 1, %s6
  %s9 = scalar_select 0, %s8, %s6
  loop: start=0, step=1, limit=4
  $region2: #{residual_block_forward.1} parent=0 // loop_pre_header
    _
  $region3: #{residual_block_forward.1} parent=0 // loop_header
    %s11 = sphi 0, %s15
    %p12 = scmp.ge.s32.totalorder %s11, 4
    %s21 = sphi 0, %s23
    %s24 = sphi 0, %s21
    %s25 = sphi 0, %s24
    %s41 = sphi 0, %s25
    %s45 = sphi 0, %s45
    %s47 = sphi 0, %s45
    %s48 = sphi 0, %s47
    %s62 = sphi 0, %s48
    %s66 = sphi 0, %s66
    %s68 = sphi 0, %s66
    %s69 = sphi 0, %s68
    %s83 = sphi 0, %s69
    %s87 = sphi 0, %s87
    %s89 = sphi 0, %s87
    %s90 = sphi 0, %s89
    %s104 = sphi 0, %s90
    %s108 = sphi 0, %s108
    %s110 = sphi 0, %s108
    %s111 = sphi 0, %s110
    %s125 = sphi 0, %s111
    %s131 = sphi 0, %s133
    %s134 = sphi 0, %s131
    %s135 = sphi 0, %s134
    %s151 = sphi 0, %s135
  $region4: #{residual_block_forward.1} parent=0 // loop_header_branch
    %14 = sbr.rel (%p12) target = $region8
  $region5: #{residual_block_forward.1} parent=0 // loop_body
    %s16 = ssub.s32 %s11, 1
    %s17 = ssub.s32 %s11, 2
    %s18 = sadd.s32 %s11, 1
    %s19 = ssub.s32 %s11, %s18
    %p20 = scmp.eq.s32.totalorder %s19, 0
    %s22 = sadd.s32 %s21, 1
    %s23 = scalar_select %p20, %s21, %s22
    %p26 = pneg %p20
    %p27 = scmp.eq.s32.totalorder %s11, 1
    %p28 = por %p26, %p27
    %p29 = scmp.ne.s32.totalorder %s21, %s24
    %p30 = scmp.eq.s32.totalorder %s11, 0
    %p31 = por %p29, %p30
    %p32 = scmp.ne.s32.totalorder %s21, %s24
    %p33 = scmp.eq.s32.totalorder %s16, 1
    %p34 = por %p32, %p33
    %p35 = scmp.ne.s32.totalorder %s24, %s25
    %p36 = scmp.eq.s32.totalorder %s16, 0
    %p37 = por %p35, %p36
    %p38 = scmp.ne.s32.totalorder %s24, %s25
    %p39 = scmp.eq.s32.totalorder %s17, 1
    %p40 = por %p38, %p39
    %p42 = scmp.ne.s32.totalorder %s25, %s41
    %p43 = scmp.eq.s32.totalorder %s17, 0
    %p44 = por %p42, %p43
    %s46 = sadd.s32 %s45, 1
    %p49 = scmp.eq.s32.totalorder %s11, 1
    %p50 = scmp.ne.s32.totalorder %s45, %s47
    %p51 = scmp.eq.s32.totalorder %s11, 0
    %p52 = por %p50, %p51
    %p53 = scmp.ne.s32.totalorder %s45, %s47
    %p54 = scmp.eq.s32.totalorder %s16, 1
    %p55 = por %p53, %p54
    %p56 = scmp.ne.s32.totalorder %s47, %s48
    %p57 = scmp.eq.s32.totalorder %s16, 0
    %p58 = por %p56, %p57
    %p59 = scmp.ne.s32.totalorder %s47, %s48
    %p60 = scmp.eq.s32.totalorder %s17, 1
    %p61 = por %p59, %p60
    %p63 = scmp.ne.s32.totalorder %s48, %s62
    %p64 = scmp.eq.s32.totalorder %s17, 0
    %p65 = por %p63, %p64
    %s67 = sadd.s32 %s66, 1
    %p70 = scmp.eq.s32.totalorder %s11, 1
    %p71 = scmp.ne.s32.totalorder %s66, %s68
    %p72 = scmp.eq.s32.totalorder %s11, 0
    %p73 = por %p71, %p72
    %p74 = scmp.ne.s32.totalorder %s66, %s68
    %p75 = scmp.eq.s32.totalorder %s16, 1
    %p76 = por %p74, %p75
    %p77 = scmp.ne.s32.totalorder %s68, %s69
    %p78 = scmp.eq.s32.totalorder %s16, 0
    %p79 = por %p77, %p78
    %p80 = scmp.ne.s32.totalorder %s68, %s69
    %p81 = scmp.eq.s32.totalorder %s17, 1
    %p82 = por %p80, %p81
    %p84 = scmp.ne.s32.totalorder %s69, %s83
    %p85 = scmp.eq.s32.totalorder %s17, 0
    %p86 = por %p84, %p85
    %s88 = sadd.s32 %s87, 1
    %p91 = scmp.eq.s32.totalorder %s11, 1
    %p92 = scmp.ne.s32.totalorder %s87, %s89
    %p93 = scmp.eq.s32.totalorder %s11, 0
    %p94 = por %p92, %p93
    %p95 = scmp.ne.s32.totalorder %s87, %s89
    %p96 = scmp.eq.s32.totalorder %s16, 1
    %p97 = por %p95, %p96
    %p98 = scmp.ne.s32.totalorder %s89, %s90
    %p99 = scmp.eq.s32.totalorder %s16, 0
    %p100 = por %p98, %p99
    %p101 = scmp.ne.s32.totalorder %s89, %s90
    %p102 = scmp.eq.s32.totalorder %s17, 1
    %p103 = por %p101, %p102
    %p105 = scmp.ne.s32.totalorder %s90, %s104
    %p106 = scmp.eq.s32.totalorder %s17, 0
    %p107 = por %p105, %p106
    %s109 = sadd.s32 %s108, 1
    %p112 = scmp.eq.s32.totalorder %s11, 1
    %p113 = scmp.ne.s32.totalorder %s108, %s110
    %p114 = scmp.eq.s32.totalorder %s11, 0
    %p115 = por %p113, %p114
    %p116 = scmp.ne.s32.totalorder %s108, %s110
    %p117 = scmp.eq.s32.totalorder %s16, 1
    %p118 = por %p116, %p117
    %p119 = scmp.ne.s32.totalorder %s110, %s111
    %p120 = scmp.eq.s32.totalorder %s16, 0
    %p121 = por %p119, %p120
    %p122 = scmp.ne.s32.totalorder %s110, %s111
    %p123 = scmp.eq.s32.totalorder %s17, 1
    %p124 = por %p122, %p123
    %p126 = scmp.ne.s32.totalorder %s111, %s125
    %p127 = scmp.eq.s32.totalorder %s17, 0
    %p128 = por %p126, %p127
    %s129 = ssub.s32 %s11, %s18
    %p130 = scmp.eq.s32.totalorder %s129, 0
    %s132 = sadd.s32 %s131, 1
    %s133 = scalar_select %p130, %s131, %s132
    %p136 = pneg %p130
    %p137 = scmp.eq.s32.totalorder %s11, 1
    %p138 = por %p136, %p137
    %p139 = scmp.ne.s32.totalorder %s131, %s134
    %p140 = scmp.eq.s32.totalorder %s11, 0
    %p141 = por %p139, %p140
    %p142 = scmp.ne.s32.totalorder %s131, %s134
    %p143 = scmp.eq.s32.totalorder %s16, 1
    %p144 = por %p142, %p143
    %p145 = scmp.ne.s32.totalorder %s134, %s135
    %p146 = scmp.eq.s32.totalorder %s16, 0
    %p147 = por %p145, %p146
    %p148 = scmp.ne.s32.totalorder %s134, %s135
    %p149 = scmp.eq.s32.totalorder %s17, 1
    %p150 = por %p148, %p149
    %p152 = scmp.ne.s32.totalorder %s135, %s151
    %p153 = scmp.eq.s32.totalorder %s17, 0
    %p154 = por %p152, %p153
    %p155 = scmp.le.s32.totalorder 1, %s11
    %p156 = scmp.lt.s32.totalorder %s11, 3
    %p157 = pnand %p155, %p156
    %p158 = pneg %p157
    // Predicated region
    $region9: #{residual_block_forward.1} parent=5 // pred_check
      _
    $region10: #{residual_block_forward.1} parent=5 // pred_check_branch
      %160 = sbr.rel (%p157) target = $region12
    $region11: #{residual_block_forward.1} parent=5 // pred_region
      %s161 = ssub.s32 %s11, 1
      // Predicated region
      $region13: #{residual_block_forward.1} parent=11 // pred_check
        %p162 = pneg %p58
      $region14: #{residual_block_forward.1} parent=11 // pred_check_branch
        %164 = sbr.rel (%p162) target = $region16
      $region15: #{residual_block_forward.1} parent=11 // pred_region
        _
      $region16: #{residual_block_forward.1} parent=11 // pred_fallthru
        _
      // Predicated region
      $region17: #{residual_block_forward.1} parent=11 // pred_check
        %p165 = pneg %p79
      $region18: #{residual_block_forward.1} parent=11 // pred_check_branch
        %167 = sbr.rel (%p165) target = $region20
      $region19: #{residual_block_forward.1} parent=11 // pred_region
        _
      $region20: #{residual_block_forward.1} parent=11 // pred_fallthru
        _
      // Predicated region
      $region21: #{residual_block_forward.1} parent=11 // pred_check
        %p168 = pneg %p100
      $region22: #{residual_block_forward.1} parent=11 // pred_check_branch
        %170 = sbr.rel (%p168) target = $region24
      $region23: #{residual_block_forward.1} parent=11 // pred_region
        _
      $region24: #{residual_block_forward.1} parent=11 // pred_fallthru
        _
      // Predicated region
      $region25: #{residual_block_forward.1} parent=11 // pred_check
        %p171 = pneg %p121
      $region26: #{residual_block_forward.1} parent=11 // pred_check_branch
        %173 = sbr.rel (%p171) target = $region28
      $region27: #{residual_block_forward.1} parent=11 // pred_region
        _
      $region28: #{residual_block_forward.1} parent=11 // pred_fallthru
        _
    $region12: #{residual_block_forward.1} parent=5 // pred_fallthru
      _
    %p174 = scmp.lt.s32.totalorder %s11, 2
    // Predicated region
    $region29: #{residual_block_forward.1} parent=5 // pred_check
      %p175 = pneg %p174
    $region30: #{residual_block_forward.1} parent=5 // pred_check_branch
      %177 = sbr.rel (%p175) target = $region32
    $region31: #{residual_block_forward.1} parent=5 // pred_region
      // Predicated region
      $region33: #{residual_block_forward.1} parent=31 // pred_check
        %p178 = pneg %p31
      $region34: #{residual_block_forward.1} parent=31 // pred_check_branch
        %180 = sbr.rel (%p178) target = $region36
      $region35: #{residual_block_forward.1} parent=31 // pred_region
        %p181 = scmp.lt.s32.totalorder %s11, 1
        %s182 = scalar_select %p181, %s11, 1
        %s183 = smul.addr %s182, 4
        %s184 = smul.addr %s183, 4
        %s185 = scalar_lea.vmem %s0, %s184
      $region36: #{residual_block_forward.1} parent=31 // pred_fallthru
        _
    $region32: #{residual_block_forward.1} parent=5 // pred_fallthru
      _
    %p186 = scmp.le.s32.totalorder 1, %s11
    %p187 = scmp.lt.s32.totalorder %s11, 3
    %p188 = pnand %p186, %p187
    %p189 = pneg %p188
    // Predicated region
    $region37: #{residual_block_forward.1} parent=5 // pred_check
      _
    $region38: #{residual_block_forward.1} parent=5 // pred_check_branch
      %191 = sbr.rel (%p188) target = $region40
    $region39: #{residual_block_forward.1} parent=5 // pred_region
      %s192 = ssub.s32 %s11, 1
      %p193 = scmp.lt.s32.totalorder %s16, 1
      %s194 = scalar_select %p193, %s16, 1
      %s195 = smul.addr %s194, 4
      %s196 = smul.addr %s195, 4
      %s197 = scalar_lea.vmem %s0, %s196
      %p198 = pneg %p37
      %p199 = pneg %p34
      %p200 = pneg %p58
      %p201 = pneg %p55
      %p202 = pneg %p79
      %p203 = pneg %p76
      %p204 = pneg %p100
      %p205 = pneg %p97
      %p206 = pneg %p121
      %p207 = pneg %p118
      %p208 = pneg %p147
      %p209 = pneg %p144
      %p210 = scmp.lt.s32.totalorder %s16, 1
      %s211 = scalar_select %p210, %s16, 1
      %s212 = smul.addr %s211, 2
      %s213 = smul.addr %s212, 4
      %s214 = scalar_lea.vmem %s5, %s213
      %p215 = scmp.lt.s32.totalorder %s16, 1
      %s216 = scalar_select %p215, %s16, 1
      %s217 = smul.addr %s216, 4
      %s218 = smul.addr %s217, 4
      %s219 = scalar_lea.vmem %s0, %s218
      %p220 = scmp.lt.s32.totalorder %s16, 1
      %s221 = scalar_select %p220, %s16, 1
      %s222 = smul.addr %s221, 2
      %s223 = smul.addr %s222, 4
      %s224 = scalar_lea.vmem %s5, %s223
      %v225 = vlaneseq
      %v226 = vand.u32 %v225, 127
      %v227 = vadd.s32 %v226, 128
      %vm228 = vcmp.lt.s32.totalorder %v226, 0
      %v229 = vsub.s32 0, %v226
      %v230 = vsel %vm228, %v229, %v226
      %v231 = vshrl.u32 %v230, 4
      %v232 = vand.u32 %v230, 15
      %v233 = vsub.s32 0, %v232
      %v234 = vsel %vm228, %v233, %v232
      %vm235 = vcmp.lt.s32.totalorder %v227, 0
      %v236 = vsub.s32 0, %v227
      %v237 = vsel %vm235, %v236, %v227
      %v238 = vshrl.u32 %v237, 4
      %v239 = vand.u32 %v237, 15
      %v240 = vsub.s32 0, %v239
      %v241 = vsel %vm235, %v240, %v239
      %vm242 = vcmp.ne.s32.totalorder %v234, 0
      %vm243 = vcmp.ne.s32.totalorder %v241, 0
      %vm244 = vcmp.lt.s32.totalorder %v234, 0
      %vm245 = vcmp.lt.s32.totalorder %v241, 0
      %vm246 = vmand %vm244, %vm242
      %vm247 = vmand %vm245, %vm243
      %v248 = vadd.s32 %v234, 16
      %v249 = vadd.s32 %v241, 16
      %v250 = vsel %vm246, %v248, %v234
      %v251 = vsel %vm247, %v249, %v241
      %vm252 = vcmp.ge.s32.totalorder %v250, 2
      %vm253 = vcmp.ge.s32.totalorder %v251, 2
      %vm254 = vcmp.lt.s32.totalorder %v250, 14
      %vm255 = vcmp.lt.s32.totalorder %v251, 14
      %v256 = vld [vmem:[%s219] sm:$0xff]
      %v257 = vld [vmem:[%s219 + $0x8] sm:$0xf]
      %v258 = vsel %vm252, 1, 0
      %v259 = vsel %vm253, 1, 0
      %vm260 = vcmp.eq.s32.totalorder %v258, 1
      %vm261 = vcmp.eq.s32.totalorder %v259, 1
      %264 = vst [vmem:[#allocation1] ss:$2 sm:$0xff] %v256
      %s265 = scalar_lea.vmem [#allocation1], 16
      %266 = vst [vmem:[%s265] ss:$2 sm:$0xff] %v257
      %v267 = vld.sshfl [vmem:[#allocation1] sm:$0xff pattern:$0x75316420]
      %v268 = vld.sshfl [vmem:[#allocation1 + $0x8] sm:$0xff pattern:$0x75316420]
      %v269 = vld.sshfl [vmem:[#allocation1 + $0x10] sm:$0xff pattern:$0x75316420]
      %270 = vrot.lane.b32.xlu0 %v267, 34
      %v271 = vpop.permute.xlu0 %270
      %272 = vrot.lane.b32.xlu0 %v268, 34
      %v273 = vpop.permute.xlu0 %272
      %274 = vrot.lane.b32.xlu0 %v269, 34
      %v275 = vpop.permute.xlu0 %274
      %vm276 = vcmask 277504
      %v277 = vsel %vm276, %v271, %v273
      %v278 = vsel %vm276, %v273, %v275
      %v281 = vsel %vm260, %v277, 0.0
      %v282 = vsel %vm261, %v278, 0.0
      %v283 = vld [vmem:[%s1] sm:$0xf]
      %v284 = vld [vmem:[%s219] sm:$0xff]
      %v285 = vld [vmem:[%s219 + $0x8] sm:$0xf]
      %s286 = scalar_lea.vmem %s1, 4
      %v287 = vld [vmem:[%s286] sm:$0xf]
      %290 = vst [vmem:[#allocation1] ss:$2 sm:$0xff] %v284
      %s291 = scalar_lea.vmem [#allocation1], 16
      %292 = vst [vmem:[%s291] ss:$2 sm:$0xff] %v285
      %v293 = vld.sshfl [vmem:[#allocation1] sm:$0xff pattern:$0x75316420]
      %v294 = vld.sshfl [vmem:[#allocation1 + $0x8] sm:$0xff pattern:$0x75316420]
      %v295 = vld.sshfl [vmem:[#allocation1 + $0x10] sm:$0xff pattern:$0x75316420]
      %296 = vrot.lane.b32.xlu0 %v293, 32
      %v297 = vpop.permute.xlu0 %296
      %298 = vrot.lane.b32.xlu0 %v294, 32
      %v299 = vpop.permute.xlu0 %298
      %300 = vrot.lane.b32.xlu0 %v295, 32
      %v301 = vpop.permute.xlu0 %300
      %vm302 = vcmask 261120
      %v303 = vsel %vm302, %v297, %v299
      %v304 = vsel %vm302, %v299, %v301
      %vm305 = vcmask 31744
      %v307 = vsel %vm305, %v287, 0
      %vm309 = vcmask 1043456
      %v310 = vsel %vm309, %v303, 0
      %v312 = vsel %vm309, %v304, 0
      %314 = vmatpush.msra.mxu0 0.0
      %315 = vmatpush.msra.mxu0 0.0
      %316 = vmatpush.msra.mxu0 0.0
      %317 = vmatpush.msra.mxu0 0.0
      %318 = vmatpush.msra.mxu0 0.0
      %319 = vmatpush.msra.mxu0 0.0
      %320 = vmatpush.msra.mxu0 0.0
      %321 = vmatpush.msra.mxu0 0.0
      %322 = vmatpush.msra.mxu0 0.0
      %323 = vmatpush.msra.mxu0 0.0
      %324 = vmatpush.msra.mxu0 0.0
      %325 = vmatpush.msra.mxu0 0.0
      %326 = vmatpush.msra.mxu0 0.0
      %327 = vmatpush.msra.mxu0 0.0
      %328 = vmatpush.msra.mxu0 0.0
      %329 = vmatpush.msra.mxu0 %v310
      %330 = vmatmul.f32.gmra.mxu0 %v307
      %v331 = vpop.f32.mrf.mxu0
      %v332 = vadd.f32 0.0, %v331
      %333 = vdwg.mxu0
      %334 = vmatpush.msra.mxu0 0.0
      %335 = vmatpush.msra.mxu0 0.0
      %336 = vmatpush.msra.mxu0 0.0
      %337 = vmatpush.msra.mxu0 0.0
      %338 = vmatpush.msra.mxu0 0.0
      %339 = vmatpush.msra.mxu0 0.0
      %340 = vmatpush.msra.mxu0 0.0
      %341 = vmatpush.msra.mxu0 0.0
      %342 = vmatpush.msra.mxu0 0.0
      %343 = vmatpush.msra.mxu0 0.0
      %344 = vmatpush.msra.mxu0 0.0
      %345 = vmatpush.msra.mxu0 0.0
      %346 = vmatpush.msra.mxu0 0.0
      %347 = vmatpush.msra.mxu0 0.0
      %348 = vmatpush.msra.mxu0 0.0
      %349 = vmatpush.msra.mxu0 %v312
      %350 = vmatmul.f32.gmra.mxu0 %v307
      %v351 = vpop.f32.mrf.mxu0
      %v352 = vadd.f32 0.0, %v351
      %353 = vdwg.mxu0
      %v355 = vsel %vm305, %v283, 0
      %v358 = vsel %vm309, %v281, 0
      %v361 = vsel %vm309, %v282, 0
      %363 = vmatpush.msra.mxu0 0.0
      %364 = vmatpush.msra.mxu0 0.0
      %365 = vmatpush.msra.mxu0 0.0
      %366 = vmatpush.msra.mxu0 0.0
      %367 = vmatpush.msra.mxu0 0.0
      %368 = vmatpush.msra.mxu0 0.0
      %369 = vmatpush.msra.mxu0 0.0
      %370 = vmatpush.msra.mxu0 0.0
      %371 = vmatpush.msra.mxu0 0.0
      %372 = vmatpush.msra.mxu0 0.0
      %373 = vmatpush.msra.mxu0 0.0
      %374 = vmatpush.msra.mxu0 0.0
      %375 = vmatpush.msra.mxu0 0.0
      %376 = vmatpush.msra.mxu0 0.0
      %377 = vmatpush.msra.mxu0 0.0
      %378 = vmatpush.msra.mxu0 %v358
      %379 = vmatmul.f32.gmra.mxu0 %v355
      %v380 = vpop.f32.mrf.mxu0
      %v381 = vadd.f32 %v332, %v380
      %382 = vdwg.mxu0
      %383 = vmatpush.msra.mxu0 0.0
      %384 = vmatpush.msra.mxu0 0.0
      %385 = vmatpush.msra.mxu0 0.0
      %386 = vmatpush.msra.mxu0 0.0
      %387 = vmatpush.msra.mxu0 0.0
      %388 = vmatpush.msra.mxu0 0.0
      %389 = vmatpush.msra.mxu0 0.0
      %390 = vmatpush.msra.mxu0 0.0
      %391 = vmatpush.msra.mxu0 0.0
      %392 = vmatpush.msra.mxu0 0.0
      %393 = vmatpush.msra.mxu0 0.0
      %394 = vmatpush.msra.mxu0 0.0
      %395 = vmatpush.msra.mxu0 0.0
      %396 = vmatpush.msra.mxu0 0.0
      %397 = vmatpush.msra.mxu0 0.0
      %398 = vmatpush.msra.mxu0 %v361
      %399 = vmatmul.f32.gmra.mxu0 %v355
      %v400 = vpop.f32.mrf.mxu0
      %v401 = vadd.f32 %v352, %v400
      %402 = vdwg.mxu0
      %v403 = vld [vmem:[%s219] sm:$0xff]
      %v404 = vld [vmem:[%s219 + $0x8] sm:$0xf]
      %v405 = vsel %vm254, 1, 0
      %v406 = vsel %vm255, 1, 0
      %vm407 = vcmp.eq.s32.totalorder %v405, 1
      %vm408 = vcmp.eq.s32.totalorder %v406, 1
      %411 = vst [vmem:[#allocation1] ss:$2 sm:$0xff] %v403
      %s412 = scalar_lea.vmem [#allocation1], 16
      %413 = vst [vmem:[%s412] ss:$2 sm:$0xff] %v404
      %v414 = vld.sshfl [vmem:[#allocation1] sm:$0xff pattern:$0x75316420]
      %v415 = vld.sshfl [vmem:[#allocation1 + $0x8] sm:$0xff pattern:$0x75316420]
      %v416 = vld.sshfl [vmem:[#allocation1 + $0x10] sm:$0xff pattern:$0x75316420]
      %417 = vrot.lane.b32.xlu0 %v414, 30
      %v418 = vpop.permute.xlu0 %417
      %419 = vrot.lane.b32.xlu0 %v415, 30
      %v420 = vpop.permute.xlu0 %419
      %421 = vrot.lane.b32.xlu0 %v416, 30
      %v422 = vpop.permute.xlu0 %421
      %vm423 = vcmask 244736
      %v424 = vsel %vm423, %v418, %v420
      %v425 = vsel %vm423, %v420, %v422
      %v428 = vsel %vm407, %v424, 0.0
      %v429 = vsel %vm408, %v425, 0.0
      %s430 = scalar_lea.vmem %s1, 8
      %v431 = vld [vmem:[%s430] sm:$0xf]
      %v433 = vsel %vm305, %v431, 0
      %v436 = vsel %vm309, %v428, 0
      %v439 = vsel %vm309, %v429, 0
      %441 = vmatpush.msra.mxu0 0.0
      %442 = vmatpush.msra.mxu0 0.0
      %443 = vmatpush.msra.mxu0 0.0
      %444 = vmatpush.msra.mxu0 0.0
      %445 = vmatpush.msra.mxu0 0.0
      %446 = vmatpush.msra.mxu0 0.0
      %447 = vmatpush.msra.mxu0 0.0
      %448 = vmatpush.msra.mxu0 0.0
      %449 = vmatpush.msra.mxu0 0.0
      %450 = vmatpush.msra.mxu0 0.0
      %451 = vmatpush.msra.mxu0 0.0
      %452 = vmatpush.msra.mxu0 0.0
      %453 = vmatpush.msra.mxu0 0.0
      %454 = vmatpush.msra.mxu0 0.0
      %455 = vmatpush.msra.mxu0 0.0
      %456 = vmatpush.msra.mxu0 %v436
      %457 = vmatmul.f32.gmra.mxu0 %v433
      %v458 = vpop.f32.mrf.mxu0
      %v459 = vadd.f32 0.0, %v458
      %460 = vdwg.mxu0
      %461 = vmatpush.msra.mxu0 0.0
      %462 = vmatpush.msra.mxu0 0.0
      %463 = vmatpush.msra.mxu0 0.0
      %464 = vmatpush.msra.mxu0 0.0
      %465 = vmatpush.msra.mxu0 0.0
      %466 = vmatpush.msra.mxu0 0.0
      %467 = vmatpush.msra.mxu0 0.0
      %468 = vmatpush.msra.mxu0 0.0
      %469 = vmatpush.msra.mxu0 0.0
      %470 = vmatpush.msra.mxu0 0.0
      %471 = vmatpush.msra.mxu0 0.0
      %472 = vmatpush.msra.mxu0 0.0
      %473 = vmatpush.msra.mxu0 0.0
      %474 = vmatpush.msra.mxu0 0.0
      %475 = vmatpush.msra.mxu0 0.0
      %476 = vmatpush.msra.mxu0 %v439
      %477 = vmatmul.f32.gmra.mxu0 %v433
      %v478 = vpop.f32.mrf.mxu0
      %v479 = vadd.f32 0.0, %v478
      %480 = vdwg.mxu0
      %v481 = vadd.f32 %v381, %v459
      %v482 = vadd.f32 %v401, %v479
      %v483 = vld [vmem:[%s219] sm:$0xff]
      %v484 = vld [vmem:[%s219 + $0x8] sm:$0xf]
      %487 = vst [vmem:[#allocation1] ss:$2 sm:$0xff] %v483
      %s488 = scalar_lea.vmem [#allocation1], 16
      %489 = vst [vmem:[%s488] ss:$2 sm:$0xff] %v484
      %v490 = vld.sshfl [vmem:[#allocation1] sm:$0xff pattern:$0x75316420]
      %v491 = vld.sshfl [vmem:[#allocation1 + $0x8] sm:$0xff pattern:$0x75316420]
      %v492 = vld.sshfl [vmem:[#allocation1 + $0x10] sm:$0xff pattern:$0x75316420]
      %493 = vrot.lane.b32.xlu0 %v490, 2
      %v494 = vpop.permute.xlu0 %493
      %495 = vrot.lane.b32.xlu0 %v491, 2
      %v496 = vpop.permute.xlu0 %495
      %497 = vrot.lane.b32.xlu0 %v492, 2
      %v498 = vpop.permute.xlu0 %497
      %vm499 = vcmask 15360
      %v500 = vsel %vm499, %v494, %v496
      %v501 = vsel %vm499, %v496, %v498
      %v504 = vsel %vm260, %v500, 0.0
      %v505 = vsel %vm261, %v501, 0.0
      %s506 = scalar_lea.vmem %s1, 12
      %v507 = vld [vmem:[%s506] sm:$0xf]
      %v509 = vsel %vm305, %v507, 0
      %v512 = vsel %vm309, %v504, 0
      %v515 = vsel %vm309, %v505, 0
      %517 = vmatpush.msra.mxu0 0.0
      %518 = vmatpush.msra.mxu0 0.0
      %519 = vmatpush.msra.mxu0 0.0
      %520 = vmatpush.msra.mxu0 0.0
      %521 = vmatpush.msra.mxu0 0.0
      %522 = vmatpush.msra.mxu0 0.0
      %523 = vmatpush.msra.mxu0 0.0
      %524 = vmatpush.msra.mxu0 0.0
      %525 = vmatpush.msra.mxu0 0.0
      %526 = vmatpush.msra.mxu0 0.0
      %527 = vmatpush.msra.mxu0 0.0
      %528 = vmatpush.msra.mxu0 0.0
      %529 = vmatpush.msra.mxu0 0.0
      %530 = vmatpush.msra.mxu0 0.0
      %531 = vmatpush.msra.mxu0 0.0
      %532 = vmatpush.msra.mxu0 %v512
      %533 = vmatmul.f32.gmra.mxu0 %v509
      %v534 = vpop.f32.mrf.mxu0
      %v535 = vadd.f32 0.0, %v534
      %536 = vdwg.mxu0
      %537 = vmatpush.msra.mxu0 0.0
      %538 = vmatpush.msra.mxu0 0.0
      %539 = vmatpush.msra.mxu0 0.0
      %540 = vmatpush.msra.mxu0 0.0
      %541 = vmatpush.msra.mxu0 0.0
      %542 = vmatpush.msra.mxu0 0.0
      %543 = vmatpush.msra.mxu0 0.0
      %544 = vmatpush.msra.mxu0 0.0
      %545 = vmatpush.msra.mxu0 0.0
      %546 = vmatpush.msra.mxu0 0.0
      %547 = vmatpush.msra.mxu0 0.0
      %548 = vmatpush.msra.mxu0 0.0
      %549 = vmatpush.msra.mxu0 0.0
      %550 = vmatpush.msra.mxu0 0.0
      %551 = vmatpush.msra.mxu0 0.0
      %552 = vmatpush.msra.mxu0 %v515
      %553 = vmatmul.f32.gmra.mxu0 %v509
      %v554 = vpop.f32.mrf.mxu0
      %v555 = vadd.f32 0.0, %v554
      %556 = vdwg.mxu0
      %v557 = vadd.f32 %v481, %v535
      %v558 = vadd.f32 %v482, %v555
      %v559 = vld [vmem:[%s219 + $0x4] sm:$0xff]
      %s560 = scalar_lea.vmem %s1, 16
      %v561 = vld [vmem:[%s560] sm:$0xf]
      %563 = vst [vmem:[#allocation1] ss:$2 sm:$0xff] %v559
      %v564 = vld.sshfl [vmem:[#allocation1] sm:$0xff pattern:$0x75316420]
      %v565 = vld.sshfl [vmem:[#allocation1 + $0x8] sm:$0xff pattern:$0x75316420]
      %v567 = vsel %vm305, %v561, 0
      %v569 = vsel %vm309, %v564, 0
      %v571 = vsel %vm309, %v565, 0
      %573 = vmatpush.msra.mxu0 0.0
      %574 = vmatpush.msra.mxu0 0.0
      %575 = vmatpush.msra.mxu0 0.0
      %576 = vmatpush.msra.mxu0 0.0
      %577 = vmatpush.msra.mxu0 0.0
      %578 = vmatpush.msra.mxu0 0.0
      %579 = vmatpush.msra.mxu0 0.0
      %580 = vmatpush.msra.mxu0 0.0
      %581 = vmatpush.msra.mxu0 0.0
      %582 = vmatpush.msra.mxu0 0.0
      %583 = vmatpush.msra.mxu0 0.0
      %584 = vmatpush.msra.mxu0 0.0
      %585 = vmatpush.msra.mxu0 0.0
      %586 = vmatpush.msra.mxu0 0.0
      %587 = vmatpush.msra.mxu0 0.0
      %588 = vmatpush.msra.mxu0 %v569
      %589 = vmatmul.f32.gmra.mxu0 %v567
      %v590 = vpop.f32.mrf.mxu0
      %v591 = vadd.f32 0.0, %v590
      %592 = vdwg.mxu0
      %593 = vmatpush.msra.mxu0 0.0
      %594 = vmatpush.msra.mxu0 0.0
      %595 = vmatpush.msra.mxu0 0.0
      %596 = vmatpush.msra.mxu0 0.0
      %597 = vmatpush.msra.mxu0 0.0
      %598 = vmatpush.msra.mxu0 0.0
      %599 = vmatpush.msra.mxu0 0.0
      %600 = vmatpush.msra.mxu0 0.0
      %601 = vmatpush.msra.mxu0 0.0
      %602 = vmatpush.msra.mxu0 0.0
      %603 = vmatpush.msra.mxu0 0.0
      %604 = vmatpush.msra.mxu0 0.0
      %605 = vmatpush.msra.mxu0 0.0
      %606 = vmatpush.msra.mxu0 0.0
      %607 = vmatpush.msra.mxu0 0.0
      %608 = vmatpush.msra.mxu0 %v571
      %609 = vmatmul.f32.gmra.mxu0 %v567
      %v610 = vpop.f32.mrf.mxu0
      %v611 = vadd.f32 0.0, %v610
      %612 = vdwg.mxu0
      %v613 = vadd.f32 %v557, %v591
      %v614 = vadd.f32 %v558, %v611
      %v615 = vld [vmem:[%s219 + $0x4] sm:$0xff]
      %v616 = vld [vmem:[%s219 + $0xc] sm:$0xf]
      %619 = vst [vmem:[#allocation1] ss:$2 sm:$0xff] %v615
      %s620 = scalar_lea.vmem [#allocation1], 16
      %621 = vst [vmem:[%s620] ss:$2 sm:$0xff] %v616
      %v622 = vld.sshfl [vmem:[#allocation1] sm:$0xff pattern:$0x75316420]
      %v623 = vld.sshfl [vmem:[#allocation1 + $0x8] sm:$0xff pattern:$0x75316420]
      %v624 = vld.sshfl [vmem:[#allocation1 + $0x10] sm:$0xff pattern:$0x75316420]
      %625 = vrot.lane.b32.xlu0 %v622, 126
      %v626 = vpop.permute.xlu0 %625
      %627 = vrot.lane.b32.xlu0 %v623, 126
      %v628 = vpop.permute.xlu0 %627
      %629 = vrot.lane.b32.xlu0 %v624, 126
      %v630 = vpop.permute.xlu0 %629
      %vm631 = vcmask 1031168
      %v632 = vsel %vm631, %v626, %v628
      %v633 = vsel %vm631, %v628, %v630
      %v636 = vsel %vm407, %v632, 0.0
      %v637 = vsel %vm408, %v633, 0.0
      %s638 = scalar_lea.vmem %s1, 20
      %v639 = vld [vmem:[%s638] sm:$0xf]
      %v641 = vsel %vm305, %v639, 0
      %v644 = vsel %vm309, %v636, 0
      %v647 = vsel %vm309, %v637, 0
      %649 = vmatpush.msra.mxu0 0.0
      %650 = vmatpush.msra.mxu0 0.0
      %651 = vmatpush.msra.mxu0 0.0
      %652 = vmatpush.msra.mxu0 0.0
      %653 = vmatpush.msra.mxu0 0.0
      %654 = vmatpush.msra.mxu0 0.0
      %655 = vmatpush.msra.mxu0 0.0
      %656 = vmatpush.msra.mxu0 0.0
      %657 = vmatpush.msra.mxu0 0.0
      %658 = vmatpush.msra.mxu0 0.0
      %659 = vmatpush.msra.mxu0 0.0
      %660 = vmatpush.msra.mxu0 0.0
      %661 = vmatpush.msra.mxu0 0.0
      %662 = vmatpush.msra.mxu0 0.0
      %663 = vmatpush.msra.mxu0 0.0
      %664 = vmatpush.msra.mxu0 %v644
      %665 = vmatmul.f32.gmra.mxu0 %v641
      %v666 = vpop.f32.mrf.mxu0
      %v667 = vadd.f32 0.0, %v666
      %668 = vdwg.mxu0
      %669 = vmatpush.msra.mxu0 0.0
      %670 = vmatpush.msra.mxu0 0.0
      %671 = vmatpush.msra.mxu0 0.0
      %672 = vmatpush.msra.mxu0 0.0
      %673 = vmatpush.msra.mxu0 0.0
      %674 = vmatpush.msra.mxu0 0.0
      %675 = vmatpush.msra.mxu0 0.0
      %676 = vmatpush.msra.mxu0 0.0
      %677 = vmatpush.msra.mxu0 0.0
      %678 = vmatpush.msra.mxu0 0.0
      %679 = vmatpush.msra.mxu0 0.0
      %680 = vmatpush.msra.mxu0 0.0
      %681 = vmatpush.msra.mxu0 0.0
      %682 = vmatpush.msra.mxu0 0.0
      %683 = vmatpush.msra.mxu0 0.0
      %684 = vmatpush.msra.mxu0 %v647
      %685 = vmatmul.f32.gmra.mxu0 %v641
      %v686 = vpop.f32.mrf.mxu0
      %v687 = vadd.f32 0.0, %v686
      %688 = vdwg.mxu0
      %v689 = vadd.f32 %v613, %v667
      %v690 = vadd.f32 %v614, %v687
      %v691 = vld [vmem:[%s219 + $0x4] sm:$0xff]
      %v692 = vld [vmem:[%s219 + $0xc] sm:$0xf]
      %695 = vst [vmem:[#allocation1] ss:$2 sm:$0xff] %v691
      %s696 = scalar_lea.vmem [#allocation1], 16
      %697 = vst [vmem:[%s696] ss:$2 sm:$0xff] %v692
      %v698 = vld.sshfl [vmem:[#allocation1] sm:$0xff pattern:$0x75316420]
      %v699 = vld.sshfl [vmem:[#allocation1 + $0x8] sm:$0xff pattern:$0x75316420]
      %v700 = vld.sshfl [vmem:[#allocation1 + $0x10] sm:$0xff pattern:$0x75316420]
      %701 = vrot.lane.b32.xlu0 %v698, 98
      %v702 = vpop.permute.xlu0 %701
      %703 = vrot.lane.b32.xlu0 %v699, 98
      %v704 = vpop.permute.xlu0 %703
      %705 = vrot.lane.b32.xlu0 %v700, 98
      %v706 = vpop.permute.xlu0 %705
      %vm707 = vcmask 801792
      %v708 = vsel %vm707, %v702, %v704
      %v709 = vsel %vm707, %v704, %v706
      %v712 = vsel %vm260, %v708, 0.0
      %v713 = vsel %vm261, %v709, 0.0
      %s714 = scalar_lea.vmem %s1, 24
      %v715 = vld [vmem:[%s714] sm:$0xf]
      %v717 = vsel %vm305, %v715, 0
      %v720 = vsel %vm309, %v712, 0
      %v723 = vsel %vm309, %v713, 0
      %725 = vmatpush.msra.mxu0 0.0
      %726 = vmatpush.msra.mxu0 0.0
      %727 = vmatpush.msra.mxu0 0.0
      %728 = vmatpush.msra.mxu0 0.0
      %729 = vmatpush.msra.mxu0 0.0
      %730 = vmatpush.msra.mxu0 0.0
      %731 = vmatpush.msra.mxu0 0.0
      %732 = vmatpush.msra.mxu0 0.0
      %733 = vmatpush.msra.mxu0 0.0
      %734 = vmatpush.msra.mxu0 0.0
      %735 = vmatpush.msra.mxu0 0.0
      %736 = vmatpush.msra.mxu0 0.0
      %737 = vmatpush.msra.mxu0 0.0
      %738 = vmatpush.msra.mxu0 0.0
      %739 = vmatpush.msra.mxu0 0.0
      %740 = vmatpush.msra.mxu0 %v720
      %741 = vmatmul.f32.gmra.mxu0 %v717
      %v742 = vpop.f32.mrf.mxu0
      %v743 = vadd.f32 0.0, %v742
      %744 = vdwg.mxu0
      %745 = vmatpush.msra.mxu0 0.0
      %746 = vmatpush.msra.mxu0 0.0
      %747 = vmatpush.msra.mxu0 0.0
      %748 = vmatpush.msra.mxu0 0.0
      %749 = vmatpush.msra.mxu0 0.0
      %750 = vmatpush.msra.mxu0 0.0
      %751 = vmatpush.msra.mxu0 0.0
      %752 = vmatpush.msra.mxu0 0.0
      %753 = vmatpush.msra.mxu0 0.0
      %754 = vmatpush.msra.mxu0 0.0
      %755 = vmatpush.msra.mxu0 0.0
      %756 = vmatpush.msra.mxu0 0.0
      %757 = vmatpush.msra.mxu0 0.0
      %758 = vmatpush.msra.mxu0 0.0
      %759 = vmatpush.msra.mxu0 0.0
      %760 = vmatpush.msra.mxu0 %v723
      %761 = vmatmul.f32.gmra.mxu0 %v717
      %v762 = vpop.f32.mrf.mxu0
      %v763 = vadd.f32 0.0, %v762
      %764 = vdwg.mxu0
      %v765 = vadd.f32 %v689, %v743
      %v766 = vadd.f32 %v690, %v763
      %v767 = vld [vmem:[%s219 + $0x4] sm:$0xff]
      %v768 = vld [vmem:[%s219 + $0xc] sm:$0xf]
      %s769 = scalar_lea.vmem %s1, 28
      %v770 = vld [vmem:[%s769] sm:$0xf]
      %773 = vst [vmem:[#allocation1] ss:$2 sm:$0xff] %v767
      %s774 = scalar_lea.vmem [#allocation1], 16
      %775 = vst [vmem:[%s774] ss:$2 sm:$0xff] %v768
      %v776 = vld.sshfl [vmem:[#allocation1] sm:$0xff pattern:$0x75316420]
      %v777 = vld.sshfl [vmem:[#allocation1 + $0x8] sm:$0xff pattern:$0x75316420]
      %v778 = vld.sshfl [vmem:[#allocation1 + $0x10] sm:$0xff pattern:$0x75316420]
      %779 = vrot.lane.b32.xlu0 %v776, 96
      %v780 = vpop.permute.xlu0 %779
      %781 = vrot.lane.b32.xlu0 %v777, 96
      %v782 = vpop.permute.xlu0 %781
      %783 = vrot.lane.b32.xlu0 %v778, 96
      %v784 = vpop.permute.xlu0 %783
      %vm785 = vcmask 785408
      %v786 = vsel %vm785, %v780, %v782
      %v787 = vsel %vm785, %v782, %v784
      %v789 = vsel %vm305, %v770, 0
      %v791 = vsel %vm309, %v786, 0
      %v793 = vsel %vm309, %v787, 0
      %795 = vmatpush.msra.mxu0 0.0
      %796 = vmatpush.msra.mxu0 0.0
      %797 = vmatpush.msra.mxu0 0.0
      %798 = vmatpush.msra.mxu0 0.0
      %799 = vmatpush.msra.mxu0 0.0
      %800 = vmatpush.msra.mxu0 0.0
      %801 = vmatpush.msra.mxu0 0.0
      %802 = vmatpush.msra.mxu0 0.0
      %803 = vmatpush.msra.mxu0 0.0
      %804 = vmatpush.msra.mxu0 0.0
      %805 = vmatpush.msra.mxu0 0.0
      %806 = vmatpush.msra.mxu0 0.0
      %807 = vmatpush.msra.mxu0 0.0
      %808 = vmatpush.msra.mxu0 0.0
      %809 = vmatpush.msra.mxu0 0.0
      %810 = vmatpush.msra.mxu0 %v791
      %811 = vmatmul.f32.gmra.mxu0 %v789
      %v812 = vpop.f32.mrf.mxu0
      %v813 = vadd.f32 0.0, %v812
      %814 = vdwg.mxu0
      %815 = vmatpush.msra.mxu0 0.0
      %816 = vmatpush.msra.mxu0 0.0
      %817 = vmatpush.msra.mxu0 0.0
      %818 = vmatpush.msra.mxu0 0.0
      %819 = vmatpush.msra.mxu0 0.0
      %820 = vmatpush.msra.mxu0 0.0
      %821 = vmatpush.msra.mxu0 0.0
      %822 = vmatpush.msra.mxu0 0.0
      %823 = vmatpush.msra.mxu0 0.0
      %824 = vmatpush.msra.mxu0 0.0
      %825 = vmatpush.msra.mxu0 0.0
      %826 = vmatpush.msra.mxu0 0.0
      %827 = vmatpush.msra.mxu0 0.0
      %828 = vmatpush.msra.mxu0 0.0
      %829 = vmatpush.msra.mxu0 0.0
      %830 = vmatpush.msra.mxu0 %v793
      %831 = vmatmul.f32.gmra.mxu0 %v789
      %v832 = vpop.f32.mrf.mxu0
      %v833 = vadd.f32 0.0, %v832
      %834 = vdwg.mxu0
      %v835 = vadd.f32 %v765, %v813
      %v836 = vadd.f32 %v766, %v833
      %v837 = vld [vmem:[%s219 + $0x4] sm:$0xff]
      %v838 = vld [vmem:[%s219 + $0xc] sm:$0xf]
      %841 = vst [vmem:[#allocation1] ss:$2 sm:$0xff] %v837
      %s842 = scalar_lea.vmem [#allocation1], 16
      %843 = vst [vmem:[%s842] ss:$2 sm:$0xff] %v838
      %v844 = vld.sshfl [vmem:[#allocation1] sm:$0xff pattern:$0x75316420]
      %v845 = vld.sshfl [vmem:[#allocation1 + $0x8] sm:$0xff pattern:$0x75316420]
      %v846 = vld.sshfl [vmem:[#allocation1 + $0x10] sm:$0xff pattern:$0x75316420]
      %847 = vrot.lane.b32.xlu0 %v844, 94
      %v848 = vpop.permute.xlu0 %847
      %849 = vrot.lane.b32.xlu0 %v845, 94
      %v850 = vpop.permute.xlu0 %849
      %851 = vrot.lane.b32.xlu0 %v846, 94
      %v852 = vpop.permute.xlu0 %851
      %vm853 = vcmask 769024
      %v854 = vsel %vm853, %v848, %v850
      %v855 = vsel %vm853, %v850, %v852
      %v858 = vsel %vm407, %v854, 0.0
      %v859 = vsel %vm408, %v855, 0.0
      %s860 = scalar_lea.vmem %s1, 32
      %v861 = vld [vmem:[%s860] sm:$0xf]
      %v863 = vsel %vm305, %v861, 0
      %v866 = vsel %vm309, %v858, 0
      %v869 = vsel %vm309, %v859, 0
      %871 = vmatpush.msra.mxu0 0.0
      %872 = vmatpush.msra.mxu0 0.0
      %873 = vmatpush.msra.mxu0 0.0
      %874 = vmatpush.msra.mxu0 0.0
      %875 = vmatpush.msra.mxu0 0.0
      %876 = vmatpush.msra.mxu0 0.0
      %877 = vmatpush.msra.mxu0 0.0
      %878 = vmatpush.msra.mxu0 0.0
      %879 = vmatpush.msra.mxu0 0.0
      %880 = vmatpush.msra.mxu0 0.0
      %881 = vmatpush.msra.mxu0 0.0
      %882 = vmatpush.msra.mxu0 0.0
      %883 = vmatpush.msra.mxu0 0.0
      %884 = vmatpush.msra.mxu0 0.0
      %885 = vmatpush.msra.mxu0 0.0
      %886 = vmatpush.msra.mxu0 %v866
      %887 = vmatmul.f32.gmra.mxu0 %v863
      %v888 = vpop.f32.mrf.mxu0
      %v889 = vadd.f32 0.0, %v888
      %890 = vdwg.mxu0
      %891 = vmatpush.msra.mxu0 0.0
      %892 = vmatpush.msra.mxu0 0.0
      %893 = vmatpush.msra.mxu0 0.0
      %894 = vmatpush.msra.mxu0 0.0
      %895 = vmatpush.msra.mxu0 0.0
      %896 = vmatpush.msra.mxu0 0.0
      %897 = vmatpush.msra.mxu0 0.0
      %898 = vmatpush.msra.mxu0 0.0
      %899 = vmatpush.msra.mxu0 0.0
      %900 = vmatpush.msra.mxu0 0.0
      %901 = vmatpush.msra.mxu0 0.0
      %902 = vmatpush.msra.mxu0 0.0
      %903 = vmatpush.msra.mxu0 0.0
      %904 = vmatpush.msra.mxu0 0.0
      %905 = vmatpush.msra.mxu0 0.0
      %906 = vmatpush.msra.mxu0 %v869
      %907 = vmatmul.f32.gmra.mxu0 %v863
      %v908 = vpop.f32.mrf.mxu0
      %v909 = vadd.f32 0.0, %v908
      %910 = vdwg.mxu0
      %v911 = vadd.f32 %v835, %v889
      %v912 = vadd.f32 %v836, %v909
      %v913 = vld [vmem:[%s2] sm:$0xf]
      %915 = vset.pattern.permute.xlu0 0
      %916 = vperm.xlu0 %915, %v913
      %v917 = vpop.permute.xlu0 %916
      %v919 = vadd.f32 %v911, %v917
      %v920 = vadd.f32 %v912, %v917
      %v921 = vsel %vm309, %v919, 0.0
      %v922 = vsel %vm309, %v920, 0.0
      %v923 = vadd.f32 %v921, %v922
      %924 = vadd.xlane.f32.xlu0 %v923
      %v925 = vpop.xlane.xlu0 %924
      %v926 = vrcp.pop 256.0
      %v927 = vmul.f32 256.0, %v926
      %v928 = vsub.f32 1.0, %v927
      %v929 = vmul.f32 %v926, %v928
      %v930 = vadd.f32 %v926, %v929
      %vm931 = vweird.f32 %v926
      %v932 = vsel %vm931, %v926, %v930
      %v933 = vmul.f32 %v925, %v932
      %v934 = vsub.f32 %v919, %v933
      %v935 = vsub.f32 %v920, %v933
      %v936 = vmul.f32 %v934, %v934
      %v937 = vmul.f32 %v935, %v935
      %v938 = vsel %vm309, %v936, 0.0
      %v939 = vsel %vm309, %v937, 0.0
      %v940 = vadd.f32 %v938, %v939
      %941 = vadd.xlane.f32.xlu0 %v940
      %v942 = vpop.xlane.xlu0 %941
      %v943 = vmul.f32 %v942, %v932
      %v944 = vadd.f32 %v943, 1e-05
      %v945 = vrsqrt.pop %v944
      %v946 = vmul.f32 %v945, %v944
      %v947 = vmul.f32 %v946, %v945
      %v948 = vmul.f32 0.5, %v947
      %v949 = vsub.f32 1.5, %v948
      %v950 = vmul.f32 %v945, %v949
      %vm951 = vweird.f32 %v944
      %vm952 = vweird.f32 %v945
      %vm953 = vmor %vm951, %vm952
      %v954 = vsel %vm953, %v945, %v950
      %v955 = vmul.f32 %v934, %v954
      %v956 = vmul.f32 %v935, %v954
      %v957 = vmax.f32 %v955, 0.0
      %v958 = vmax.f32 %v956, 0.0
      %959 = vst [vmem:[#allocation2] sm:$0xf] 0.0
      %960 = vst [vmem:[#allocation2 + $0xc] sm:$0xf] 0.0
      %v963 = vrot.slane %v958, 4
      %v964 = vsel %vm309, %v957, %v963
      %966 = vst [vmem:[#allocation2 + $0x4] sm:$0xff] %v964
      %v967 = vld [vmem:[#allocation2] sm:$0xff]
      %v968 = vld [vmem:[#allocation2 + $0x8] sm:$0xf]
      %971 = vst [vmem:[#allocation1] ss:$2 sm:$0xff] %v967
      %s972 = scalar_lea.vmem [#allocation1], 16
      %973 = vst [vmem:[%s972] ss:$2 sm:$0xff] %v968
      %v974 = vld.sshfl [vmem:[#allocation1] sm:$0xff pattern:$0x75316420]
      %v975 = vld.sshfl [vmem:[#allocation1 + $0x8] sm:$0xff pattern:$0x75316420]
      %v976 = vld.sshfl [vmem:[#allocation1 + $0x10] sm:$0xff pattern:$0x75316420]
      %977 = vrot.lane.b32.xlu0 %v974, 34
      %v978 = vpop.permute.xlu0 %977
      %979 = vrot.lane.b32.xlu0 %v975, 34
      %v980 = vpop.permute.xlu0 %979
      %981 = vrot.lane.b32.xlu0 %v976, 34
      %v982 = vpop.permute.xlu0 %981
      %v983 = vsel %vm276, %v978, %v980
      %v984 = vsel %vm276, %v980, %v982
      %v987 = vsel %vm260, %v983, 0.0
      %v988 = vsel %vm261, %v984, 0.0
      %v989 = vld [vmem:[%s3] sm:$0xf]
      %v990 = vld [vmem:[#allocation2] sm:$0xff]
      %v991 = vld [vmem:[#allocation2 + $0x8] sm:$0xf]
      %s992 = scalar_lea.vmem %s3, 4
      %v993 = vld [vmem:[%s992] sm:$0xf]
      %996 = vst [vmem:[#allocation1] ss:$2 sm:$0xff] %v990
      %s997 = scalar_lea.vmem [#allocation1], 16
      %998 = vst [vmem:[%s997] ss:$2 sm:$0xff] %v991
      %v999 = vld.sshfl [vmem:[#allocation1] sm:$0xff pattern:$0x75316420]
      %v1000 = vld.sshfl [vmem:[#allocation1 + $0x8] sm:$0xff pattern:$0x75316420]
      %v1001 = vld.sshfl [vmem:[#allocation1 + $0x10] sm:$0xff pattern:$0x75316420]
      %1002 = vrot.lane.b32.xlu0 %v999, 32
      %v1003 = vpop.permute.xlu0 %1002
      %1004 = vrot.lane.b32.xlu0 %v1000, 32
      %v1005 = vpop.permute.xlu0 %1004
      %1006 = vrot.lane.b32.xlu0 %v1001, 32
      %v1007 = vpop.permute.xlu0 %1006
      %v1008 = vsel %vm302, %v1003, %v1005
      %v1009 = vsel %vm302, %v1005, %v1007
      %v1011 = vsel %vm305, %v993, 0
      %v1013 = vsel %vm309, %v1008, 0
      %v1015 = vsel %vm309, %v1009, 0
      %1017 = vmatpush.msra.mxu0 0.0
      %1018 = vmatpush.msra.mxu0 0.0
      %1019 = vmatpush.msra.mxu0 0.0
      %1020 = vmatpush.msra.mxu0 0.0
      %1021 = vmatpush.msra.mxu0 0.0
      %1022 = vmatpush.msra.mxu0 0.0
      %1023 = vmatpush.msra.mxu0 0.0
      %1024 = vmatpush.msra.mxu0 0.0
      %1025 = vmatpush.msra.mxu0 0.0
      %1026 = vmatpush.msra.mxu0 0.0
      %1027 = vmatpush.msra.mxu0 0.0
      %1028 = vmatpush.msra.mxu0 0.0
      %1029 = vmatpush.msra.mxu0 0.0
      %1030 = vmatpush.msra.mxu0 0.0
      %1031 = vmatpush.msra.mxu0 0.0
      %1032 = vmatpush.msra.mxu0 %v1013
      %1033 = vmatmul.f32.gmra.mxu0 %v1011
      %v1034 = vpop.f32.mrf.mxu0
      %v1035 = vadd.f32 0.0, %v1034
      %1036 = vdwg.mxu0
      %1037 = vmatpush.msra.mxu0 0.0
      %1038 = vmatpush.msra.mxu0 0.0
      %1039 = vmatpush.msra.mxu0 0.0
      %1040 = vmatpush.msra.mxu0 0.0
      %1041 = vmatpush.msra.mxu0 0.0
      %1042 = vmatpush.msra.mxu0 0.0
      %1043 = vmatpush.msra.mxu0 0.0
      %1044 = vmatpush.msra.mxu0 0.0
      %1045 = vmatpush.msra.mxu0 0.0
      %1046 = vmatpush.msra.mxu0 0.0
      %1047 = vmatpush.msra.mxu0 0.0
      %1048 = vmatpush.msra.mxu0 0.0
      %1049 = vmatpush.msra.mxu0 0.0
      %1050 = vmatpush.msra.mxu0 0.0
      %1051 = vmatpush.msra.mxu0 0.0
      %1052 = vmatpush.msra.mxu0 %v1015
      %1053 = vmatmul.f32.gmra.mxu0 %v1011
      %v1054 = vpop.f32.mrf.mxu0
      %v1055 = vadd.f32 0.0, %v1054
      %1056 = vdwg.mxu0
      %v1058 = vsel %vm305, %v989, 0
      %v1061 = vsel %vm309, %v987, 0
      %v1064 = vsel %vm309, %v988, 0
      %1066 = vmatpush.msra.mxu0 0.0
      %1067 = vmatpush.msra.mxu0 0.0
      %1068 = vmatpush.msra.mxu0 0.0
      %1069 = vmatpush.msra.mxu0 0.0
      %1070 = vmatpush.msra.mxu0 0.0
      %1071 = vmatpush.msra.mxu0 0.0
      %1072 = vmatpush.msra.mxu0 0.0
      %1073 = vmatpush.msra.mxu0 0.0
      %1074 = vmatpush.msra.mxu0 0.0
      %1075 = vmatpush.msra.mxu0 0.0
      %1076 = vmatpush.msra.mxu0 0.0
      %1077 = vmatpush.msra.mxu0 0.0
      %1078 = vmatpush.msra.mxu0 0.0
      %1079 = vmatpush.msra.mxu0 0.0
      %1080 = vmatpush.msra.mxu0 0.0
      %1081 = vmatpush.msra.mxu0 %v1061
      %1082 = vmatmul.f32.gmra.mxu0 %v1058
      %v1083 = vpop.f32.mrf.mxu0
      %v1084 = vadd.f32 %v1035, %v1083
      %1085 = vdwg.mxu0
      %1086 = vmatpush.msra.mxu0 0.0
      %1087 = vmatpush.msra.mxu0 0.0
      %1088 = vmatpush.msra.mxu0 0.0
      %1089 = vmatpush.msra.mxu0 0.0
      %1090 = vmatpush.msra.mxu0 0.0
      %1091 = vmatpush.msra.mxu0 0.0
      %1092 = vmatpush.msra.mxu0 0.0
      %1093 = vmatpush.msra.mxu0 0.0
      %1094 = vmatpush.msra.mxu0 0.0
      %1095 = vmatpush.msra.mxu0 0.0
      %1096 = vmatpush.msra.mxu0 0.0
      %1097 = vmatpush.msra.mxu0 0.0
      %1098 = vmatpush.msra.mxu0 0.0
      %1099 = vmatpush.msra.mxu0 0.0
      %1100 = vmatpush.msra.mxu0 0.0
      %1101 = vmatpush.msra.mxu0 %v1064
      %1102 = vmatmul.f32.gmra.mxu0 %v1058
      %v1103 = vpop.f32.mrf.mxu0
      %v1104 = vadd.f32 %v1055, %v1103
      %1105 = vdwg.mxu0
      %v1106 = vld [vmem:[#allocation2] sm:$0xff]
      %v1107 = vld [vmem:[#allocation2 + $0x8] sm:$0xf]
      %1110 = vst [vmem:[#allocation1] ss:$2 sm:$0xff] %v1106
      %s1111 = scalar_lea.vmem [#allocation1], 16
      %1112 = vst [vmem:[%s1111] ss:$2 sm:$0xff] %v1107
      %v1113 = vld.sshfl [vmem:[#allocation1] sm:$0xff pattern:$0x75316420]
      %v1114 = vld.sshfl [vmem:[#allocation1 + $0x8] sm:$0xff pattern:$0x75316420]
      %v1115 = vld.sshfl [vmem:[#allocation1 + $0x10] sm:$0xff pattern:$0x75316420]
      %1116 = vrot.lane.b32.xlu0 %v1113, 30
      %v1117 = vpop.permute.xlu0 %1116
      %1118 = vrot.lane.b32.xlu0 %v1114, 30
      %v1119 = vpop.permute.xlu0 %1118
      %1120 = vrot.lane.b32.xlu0 %v1115, 30
      %v1121 = vpop.permute.xlu0 %1120
      %v1122 = vsel %vm423, %v1117, %v1119
      %v1123 = vsel %vm423, %v1119, %v1121
      %v1126 = vsel %vm407, %v1122, 0.0
      %v1127 = vsel %vm408, %v1123, 0.0
      %s1128 = scalar_lea.vmem %s3, 8
      %v1129 = vld [vmem:[%s1128] sm:$0xf]
      %v1131 = vsel %vm305, %v1129, 0
      %v1134 = vsel %vm309, %v1126, 0
      %v1137 = vsel %vm309, %v1127, 0
      %1139 = vmatpush.msra.mxu0 0.0
      %1140 = vmatpush.msra.mxu0 0.0
      %1141 = vmatpush.msra.mxu0 0.0
      %1142 = vmatpush.msra.mxu0 0.0
      %1143 = vmatpush.msra.mxu0 0.0
      %1144 = vmatpush.msra.mxu0 0.0
      %1145 = vmatpush.msra.mxu0 0.0
      %1146 = vmatpush.msra.mxu0 0.0
      %1147 = vmatpush.msra.mxu0 0.0
      %1148 = vmatpush.msra.mxu0 0.0
      %1149 = vmatpush.msra.mxu0 0.0
      %1150 = vmatpush.msra.mxu0 0.0
      %1151 = vmatpush.msra.mxu0 0.0
      %1152 = vmatpush.msra.mxu0 0.0
      %1153 = vmatpush.msra.mxu0 0.0
      %1154 = vmatpush.msra.mxu0 %v1134
      %1155 = vmatmul.f32.gmra.mxu0 %v1131
      %v1156 = vpop.f32.mrf.mxu0
      %v1157 = vadd.f32 0.0, %v1156
      %1158 = vdwg.mxu0
      %1159 = vmatpush.msra.mxu0 0.0
      %1160 = vmatpush.msra.mxu0 0.0
      %1161 = vmatpush.msra.mxu0 0.0
      %1162 = vmatpush.msra.mxu0 0.0
      %1163 = vmatpush.msra.mxu0 0.0
      %1164 = vmatpush.msra.mxu0 0.0
      %1165 = vmatpush.msra.mxu0 0.0
      %1166 = vmatpush.msra.mxu0 0.0
      %1167 = vmatpush.msra.mxu0 0.0
      %1168 = vmatpush.msra.mxu0 0.0
      %1169 = vmatpush.msra.mxu0 0.0
      %1170 = vmatpush.msra.mxu0 0.0
      %1171 = vmatpush.msra.mxu0 0.0
      %1172 = vmatpush.msra.mxu0 0.0
      %1173 = vmatpush.msra.mxu0 0.0
      %1174 = vmatpush.msra.mxu0 %v1137
      %1175 = vmatmul.f32.gmra.mxu0 %v1131
      %v1176 = vpop.f32.mrf.mxu0
      %v1177 = vadd.f32 0.0, %v1176
      %1178 = vdwg.mxu0
      %v1179 = vadd.f32 %v1084, %v1157
      %v1180 = vadd.f32 %v1104, %v1177
      %v1181 = vld [vmem:[#allocation2] sm:$0xff]
      %v1182 = vld [vmem:[#allocation2 + $0x8] sm:$0xf]
      %1185 = vst [vmem:[#allocation1] ss:$2 sm:$0xff] %v1181
      %s1186 = scalar_lea.vmem [#allocation1], 16
      %1187 = vst [vmem:[%s1186] ss:$2 sm:$0xff] %v1182
      %v1188 = vld.sshfl [vmem:[#allocation1] sm:$0xff pattern:$0x75316420]
      %v1189 = vld.sshfl [vmem:[#allocation1 + $0x8] sm:$0xff pattern:$0x75316420]
      %v1190 = vld.sshfl [vmem:[#allocation1 + $0x10] sm:$0xff pattern:$0x75316420]
      %1191 = vrot.lane.b32.xlu0 %v1188, 2
      %v1192 = vpop.permute.xlu0 %1191
      %1193 = vrot.lane.b32.xlu0 %v1189, 2
      %v1194 = vpop.permute.xlu0 %1193
      %1195 = vrot.lane.b32.xlu0 %v1190, 2
      %v1196 = vpop.permute.xlu0 %1195
      %v1197 = vsel %vm499, %v1192, %v1194
      %v1198 = vsel %vm499, %v1194, %v1196
      %v1201 = vsel %vm260, %v1197, 0.0
      %v1202 = vsel %vm261, %v1198, 0.0
      %s1203 = scalar_lea.vmem %s3, 12
      %v1204 = vld [vmem:[%s1203] sm:$0xf]
      %v1206 = vsel %vm305, %v1204, 0
      %v1209 = vsel %vm309, %v1201, 0
      %v1212 = vsel %vm309, %v1202, 0
      %1214 = vmatpush.msra.mxu0 0.0
      %1215 = vmatpush.msra.mxu0 0.0
      %1216 = vmatpush.msra.mxu0 0.0
      %1217 = vmatpush.msra.mxu0 0.0
      %1218 = vmatpush.msra.mxu0 0.0
      %1219 = vmatpush.msra.mxu0 0.0
      %1220 = vmatpush.msra.mxu0 0.0
      %1221 = vmatpush.msra.mxu0 0.0
      %1222 = vmatpush.msra.mxu0 0.0
      %1223 = vmatpush.msra.mxu0 0.0
      %1224 = vmatpush.msra.mxu0 0.0
      %1225 = vmatpush.msra.mxu0 0.0
      %1226 = vmatpush.msra.mxu0 0.0
      %1227 = vmatpush.msra.mxu0 0.0
      %1228 = vmatpush.msra.mxu0 0.0
      %1229 = vmatpush.msra.mxu0 %v1209
      %1230 = vmatmul.f32.gmra.mxu0 %v1206
      %v1231 = vpop.f32.mrf.mxu0
      %v1232 = vadd.f32 0.0, %v1231
      %1233 = vdwg.mxu0
      %1234 = vmatpush.msra.mxu0 0.0
      %1235 = vmatpush.msra.mxu0 0.0
      %1236 = vmatpush.msra.mxu0 0.0
      %1237 = vmatpush.msra.mxu0 0.0
      %1238 = vmatpush.msra.mxu0 0.0
      %1239 = vmatpush.msra.mxu0 0.0
      %1240 = vmatpush.msra.mxu0 0.0
      %1241 = vmatpush.msra.mxu0 0.0
      %1242 = vmatpush.msra.mxu0 0.0
      %1243 = vmatpush.msra.mxu0 0.0
      %1244 = vmatpush.msra.mxu0 0.0
      %1245 = vmatpush.msra.mxu0 0.0
      %1246 = vmatpush.msra.mxu0 0.0
      %1247 = vmatpush.msra.mxu0 0.0
      %1248 = vmatpush.msra.mxu0 0.0
      %1249 = vmatpush.msra.mxu0 %v1212
      %1250 = vmatmul.f32.gmra.mxu0 %v1206
      %v1251 = vpop.f32.mrf.mxu0
      %v1252 = vadd.f32 0.0, %v1251
      %1253 = vdwg.mxu0
      %v1254 = vadd.f32 %v1179, %v1232
      %v1255 = vadd.f32 %v1180, %v1252
      %v1256 = vld [vmem:[#allocation2 + $0x4] sm:$0xff]
      %s1257 = scalar_lea.vmem %s3, 16
      %v1258 = vld [vmem:[%s1257] sm:$0xf]
      %1260 = vst [vmem:[#allocation1] ss:$2 sm:$0xff] %v1256
      %v1261 = vld.sshfl [vmem:[#allocation1] sm:$0xff pattern:$0x75316420]
      %v1262 = vld.sshfl [vmem:[#allocation1 + $0x8] sm:$0xff pattern:$0x75316420]
      %v1264 = vsel %vm305, %v1258, 0
      %v1266 = vsel %vm309, %v1261, 0
      %v1268 = vsel %vm309, %v1262, 0
      %1270 = vmatpush.msra.mxu0 0.0
      %1271 = vmatpush.msra.mxu0 0.0
      %1272 = vmatpush.msra.mxu0 0.0
      %1273 = vmatpush.msra.mxu0 0.0
      %1274 = vmatpush.msra.mxu0 0.0
      %1275 = vmatpush.msra.mxu0 0.0
      %1276 = vmatpush.msra.mxu0 0.0
      %1277 = vmatpush.msra.mxu0 0.0
      %1278 = vmatpush.msra.mxu0 0.0
      %1279 = vmatpush.msra.mxu0 0.0
      %1280 = vmatpush.msra.mxu0 0.0
      %1281 = vmatpush.msra.mxu0 0.0
      %1282 = vmatpush.msra.mxu0 0.0
      %1283 = vmatpush.msra.mxu0 0.0
      %1284 = vmatpush.msra.mxu0 0.0
      %1285 = vmatpush.msra.mxu0 %v1266
      %1286 = vmatmul.f32.gmra.mxu0 %v1264
      %v1287 = vpop.f32.mrf.mxu0
      %v1288 = vadd.f32 0.0, %v1287
      %1289 = vdwg.mxu0
      %1290 = vmatpush.msra.mxu0 0.0
      %1291 = vmatpush.msra.mxu0 0.0
      %1292 = vmatpush.msra.mxu0 0.0
      %1293 = vmatpush.msra.mxu0 0.0
      %1294 = vmatpush.msra.mxu0 0.0
      %1295 = vmatpush.msra.mxu0 0.0
      %1296 = vmatpush.msra.mxu0 0.0
      %1297 = vmatpush.msra.mxu0 0.0
      %1298 = vmatpush.msra.mxu0 0.0
      %1299 = vmatpush.msra.mxu0 0.0
      %1300 = vmatpush.msra.mxu0 0.0
      %1301 = vmatpush.msra.mxu0 0.0
      %1302 = vmatpush.msra.mxu0 0.0
      %1303 = vmatpush.msra.mxu0 0.0
      %1304 = vmatpush.msra.mxu0 0.0
      %1305 = vmatpush.msra.mxu0 %v1268
      %1306 = vmatmul.f32.gmra.mxu0 %v1264
      %v1307 = vpop.f32.mrf.mxu0
      %v1308 = vadd.f32 0.0, %v1307
      %1309 = vdwg.mxu0
      %v1310 = vadd.f32 %v1254, %v1288
      %v1311 = vadd.f32 %v1255, %v1308
      %v1312 = vld [vmem:[#allocation2 + $0x4] sm:$0xff]
      %v1313 = vld [vmem:[#allocation2 + $0xc] sm:$0xf]
      %1316 = vst [vmem:[#allocation1] ss:$2 sm:$0xff] %v1312
      %s1317 = scalar_lea.vmem [#allocation1], 16
      %1318 = vst [vmem:[%s1317] ss:$2 sm:$0xff] %v1313
      %v1319 = vld.sshfl [vmem:[#allocation1] sm:$0xff pattern:$0x75316420]
      %v1320 = vld.sshfl [vmem:[#allocation1 + $0x8] sm:$0xff pattern:$0x75316420]
      %v1321 = vld.sshfl [vmem:[#allocation1 + $0x10] sm:$0xff pattern:$0x75316420]
      %1322 = vrot.lane.b32.xlu0 %v1319, 126
      %v1323 = vpop.permute.xlu0 %1322
      %1324 = vrot.lane.b32.xlu0 %v1320, 126
      %v1325 = vpop.permute.xlu0 %1324
      %1326 = vrot.lane.b32.xlu0 %v1321, 126
      %v1327 = vpop.permute.xlu0 %1326
      %v1328 = vsel %vm631, %v1323, %v1325
      %v1329 = vsel %vm631, %v1325, %v1327
      %v1332 = vsel %vm407, %v1328, 0.0
      %v1333 = vsel %vm408, %v1329, 0.0
      %s1334 = scalar_lea.vmem %s3, 20
      %v1335 = vld [vmem:[%s1334] sm:$0xf]
      %v1337 = vsel %vm305, %v1335, 0
      %v1340 = vsel %vm309, %v1332, 0
      %v1343 = vsel %vm309, %v1333, 0
      %1345 = vmatpush.msra.mxu0 0.0
      %1346 = vmatpush.msra.mxu0 0.0
      %1347 = vmatpush.msra.mxu0 0.0
      %1348 = vmatpush.msra.mxu0 0.0
      %1349 = vmatpush.msra.mxu0 0.0
      %1350 = vmatpush.msra.mxu0 0.0
      %1351 = vmatpush.msra.mxu0 0.0
      %1352 = vmatpush.msra.mxu0 0.0
      %1353 = vmatpush.msra.mxu0 0.0
      %1354 = vmatpush.msra.mxu0 0.0
      %1355 = vmatpush.msra.mxu0 0.0
      %1356 = vmatpush.msra.mxu0 0.0
      %1357 = vmatpush.msra.mxu0 0.0
      %1358 = vmatpush.msra.mxu0 0.0
      %1359 = vmatpush.msra.mxu0 0.0
      %1360 = vmatpush.msra.mxu0 %v1340
      %1361 = vmatmul.f32.gmra.mxu0 %v1337
      %v1362 = vpop.f32.mrf.mxu0
      %v1363 = vadd.f32 0.0, %v1362
      %1364 = vdwg.mxu0
      %1365 = vmatpush.msra.mxu0 0.0
      %1366 = vmatpush.msra.mxu0 0.0
      %1367 = vmatpush.msra.mxu0 0.0
      %1368 = vmatpush.msra.mxu0 0.0
      %1369 = vmatpush.msra.mxu0 0.0
      %1370 = vmatpush.msra.mxu0 0.0
      %1371 = vmatpush.msra.mxu0 0.0
      %1372 = vmatpush.msra.mxu0 0.0
      %1373 = vmatpush.msra.mxu0 0.0
      %1374 = vmatpush.msra.mxu0 0.0
      %1375 = vmatpush.msra.mxu0 0.0
      %1376 = vmatpush.msra.mxu0 0.0
      %1377 = vmatpush.msra.mxu0 0.0
      %1378 = vmatpush.msra.mxu0 0.0
      %1379 = vmatpush.msra.mxu0 0.0
      %1380 = vmatpush.msra.mxu0 %v1343
      %1381 = vmatmul.f32.gmra.mxu0 %v1337
      %v1382 = vpop.f32.mrf.mxu0
      %v1383 = vadd.f32 0.0, %v1382
      %1384 = vdwg.mxu0
      %v1385 = vadd.f32 %v1310, %v1363
      %v1386 = vadd.f32 %v1311, %v1383
      %v1387 = vld [vmem:[#allocation2 + $0x4] sm:$0xff]
      %v1388 = vld [vmem:[#allocation2 + $0xc] sm:$0xf]
      %1391 = vst [vmem:[#allocation1] ss:$2 sm:$0xff] %v1387
      %s1392 = scalar_lea.vmem [#allocation1], 16
      %1393 = vst [vmem:[%s1392] ss:$2 sm:$0xff] %v1388
      %v1394 = vld.sshfl [vmem:[#allocation1] sm:$0xff pattern:$0x75316420]
      %v1395 = vld.sshfl [vmem:[#allocation1 + $0x8] sm:$0xff pattern:$0x75316420]
      %v1396 = vld.sshfl [vmem:[#allocation1 + $0x10] sm:$0xff pattern:$0x75316420]
      %1397 = vrot.lane.b32.xlu0 %v1394, 98
      %v1398 = vpop.permute.xlu0 %1397
      %1399 = vrot.lane.b32.xlu0 %v1395, 98
      %v1400 = vpop.permute.xlu0 %1399
      %1401 = vrot.lane.b32.xlu0 %v1396, 98
      %v1402 = vpop.permute.xlu0 %1401
      %v1403 = vsel %vm707, %v1398, %v1400
      %v1404 = vsel %vm707, %v1400, %v1402
      %v1407 = vsel %vm260, %v1403, 0.0
      %v1408 = vsel %vm261, %v1404, 0.0
      %s1409 = scalar_lea.vmem %s3, 24
      %v1410 = vld [vmem:[%s1409] sm:$0xf]
      %v1412 = vsel %vm305, %v1410, 0
      %v1415 = vsel %vm309, %v1407, 0
      %v1418 = vsel %vm309, %v1408, 0
      %1420 = vmatpush.msra.mxu0 0.0
      %1421 = vmatpush.msra.mxu0 0.0
      %1422 = vmatpush.msra.mxu0 0.0
      %1423 = vmatpush.msra.mxu0 0.0
      %1424 = vmatpush.msra.mxu0 0.0
      %1425 = vmatpush.msra.mxu0 0.0
      %1426 = vmatpush.msra.mxu0 0.0
      %1427 = vmatpush.msra.mxu0 0.0
      %1428 = vmatpush.msra.mxu0 0.0
      %1429 = vmatpush.msra.mxu0 0.0
      %1430 = vmatpush.msra.mxu0 0.0
      %1431 = vmatpush.msra.mxu0 0.0
      %1432 = vmatpush.msra.mxu0 0.0
      %1433 = vmatpush.msra.mxu0 0.0
      %1434 = vmatpush.msra.mxu0 0.0
      %1435 = vmatpush.msra.mxu0 %v1415
      %1436 = vmatmul.f32.gmra.mxu0 %v1412
      %v1437 = vpop.f32.mrf.mxu0
      %v1438 = vadd.f32 0.0, %v1437
      %1439 = vdwg.mxu0
      %1440 = vmatpush.msra.mxu0 0.0
      %1441 = vmatpush.msra.mxu0 0.0
      %1442 = vmatpush.msra.mxu0 0.0
      %1443 = vmatpush.msra.mxu0 0.0
      %1444 = vmatpush.msra.mxu0 0.0
      %1445 = vmatpush.msra.mxu0 0.0
      %1446 = vmatpush.msra.mxu0 0.0
      %1447 = vmatpush.msra.mxu0 0.0
      %1448 = vmatpush.msra.mxu0 0.0
      %1449 = vmatpush.msra.mxu0 0.0
      %1450 = vmatpush.msra.mxu0 0.0
      %1451 = vmatpush.msra.mxu0 0.0
      %1452 = vmatpush.msra.mxu0 0.0
      %1453 = vmatpush.msra.mxu0 0.0
      %1454 = vmatpush.msra.mxu0 0.0
      %1455 = vmatpush.msra.mxu0 %v1418
      %1456 = vmatmul.f32.gmra.mxu0 %v1412
      %v1457 = vpop.f32.mrf.mxu0
      %v1458 = vadd.f32 0.0, %v1457
      %1459 = vdwg.mxu0
      %v1460 = vadd.f32 %v1385, %v1438
      %v1461 = vadd.f32 %v1386, %v1458
      %v1462 = vld [vmem:[#allocation2 + $0x4] sm:$0xff]
      %v1463 = vld [vmem:[#allocation2 + $0xc] sm:$0xf]
      %s1464 = scalar_lea.vmem %s3, 28
      %v1465 = vld [vmem:[%s1464] sm:$0xf]
      %1468 = vst [vmem:[#allocation1] ss:$2 sm:$0xff] %v1462
      %s1469 = scalar_lea.vmem [#allocation1], 16
      %1470 = vst [vmem:[%s1469] ss:$2 sm:$0xff] %v1463
      %v1471 = vld.sshfl [vmem:[#allocation1] sm:$0xff pattern:$0x75316420]
      %v1472 = vld.sshfl [vmem:[#allocation1 + $0x8] sm:$0xff pattern:$0x75316420]
      %v1473 = vld.sshfl [vmem:[#allocation1 + $0x10] sm:$0xff pattern:$0x75316420]
      %1474 = vrot.lane.b32.xlu0 %v1471, 96
      %v1475 = vpop.permute.xlu0 %1474
      %1476 = vrot.lane.b32.xlu0 %v1472, 96
      %v1477 = vpop.permute.xlu0 %1476
      %1478 = vrot.lane.b32.xlu0 %v1473, 96
      %v1479 = vpop.permute.xlu0 %1478
      %v1480 = vsel %vm785, %v1475, %v1477
      %v1481 = vsel %vm785, %v1477, %v1479
      %v1483 = vsel %vm305, %v1465, 0
      %v1485 = vsel %vm309, %v1480, 0
      %v1487 = vsel %vm309, %v1481, 0
      %1489 = vmatpush.msra.mxu0 0.0
      %1490 = vmatpush.msra.mxu0 0.0
      %1491 = vmatpush.msra.mxu0 0.0
      %1492 = vmatpush.msra.mxu0 0.0
      %1493 = vmatpush.msra.mxu0 0.0
      %1494 = vmatpush.msra.mxu0 0.0
      %1495 = vmatpush.msra.mxu0 0.0
      %1496 = vmatpush.msra.mxu0 0.0
      %1497 = vmatpush.msra.mxu0 0.0
      %1498 = vmatpush.msra.mxu0 0.0
      %1499 = vmatpush.msra.mxu0 0.0
      %1500 = vmatpush.msra.mxu0 0.0
      %1501 = vmatpush.msra.mxu0 0.0
      %1502 = vmatpush.msra.mxu0 0.0
      %1503 = vmatpush.msra.mxu0 0.0
      %1504 = vmatpush.msra.mxu0 %v1485
      %1505 = vmatmul.f32.gmra.mxu0 %v1483
      %v1506 = vpop.f32.mrf.mxu0
      %v1507 = vadd.f32 0.0, %v1506
      %1508 = vdwg.mxu0
      %1509 = vmatpush.msra.mxu0 0.0
      %1510 = vmatpush.msra.mxu0 0.0
      %1511 = vmatpush.msra.mxu0 0.0
      %1512 = vmatpush.msra.mxu0 0.0
      %1513 = vmatpush.msra.mxu0 0.0
      %1514 = vmatpush.msra.mxu0 0.0
      %1515 = vmatpush.msra.mxu0 0.0
      %1516 = vmatpush.msra.mxu0 0.0
      %1517 = vmatpush.msra.mxu0 0.0
      %1518 = vmatpush.msra.mxu0 0.0
      %1519 = vmatpush.msra.mxu0 0.0
      %1520 = vmatpush.msra.mxu0 0.0
      %1521 = vmatpush.msra.mxu0 0.0
      %1522 = vmatpush.msra.mxu0 0.0
      %1523 = vmatpush.msra.mxu0 0.0
      %1524 = vmatpush.msra.mxu0 %v1487
      %1525 = vmatmul.f32.gmra.mxu0 %v1483
      %v1526 = vpop.f32.mrf.mxu0
      %v1527 = vadd.f32 0.0, %v1526
      %1528 = vdwg.mxu0
      %v1529 = vadd.f32 %v1460, %v1507
      %v1530 = vadd.f32 %v1461, %v1527
      %v1531 = vld [vmem:[#allocation2 + $0x4] sm:$0xff]
      %v1532 = vld [vmem:[#allocation2 + $0xc] sm:$0xf]
      %1535 = vst [vmem:[#allocation1] ss:$2 sm:$0xff] %v1531
      %s1536 = scalar_lea.vmem [#allocation1], 16
      %1537 = vst [vmem:[%s1536] ss:$2 sm:$0xff] %v1532
      %v1538 = vld.sshfl [vmem:[#allocation1] sm:$0xff pattern:$0x75316420]
      %v1539 = vld.sshfl [vmem:[#allocation1 + $0x8] sm:$0xff pattern:$0x75316420]
      %v1540 = vld.sshfl [vmem:[#allocation1 + $0x10] sm:$0xff pattern:$0x75316420]
      %1541 = vrot.lane.b32.xlu0 %v1538, 94
      %v1542 = vpop.permute.xlu0 %1541
      %1543 = vrot.lane.b32.xlu0 %v1539, 94
      %v1544 = vpop.permute.xlu0 %1543
      %1545 = vrot.lane.b32.xlu0 %v1540, 94
      %v1546 = vpop.permute.xlu0 %1545
      %v1547 = vsel %vm853, %v1542, %v1544
      %v1548 = vsel %vm853, %v1544, %v1546
      %v1551 = vsel %vm407, %v1547, 0.0
      %v1552 = vsel %vm408, %v1548, 0.0
      %s1553 = scalar_lea.vmem %s3, 32
      %v1554 = vld [vmem:[%s1553] sm:$0xf]
      %v1556 = vsel %vm305, %v1554, 0
      %v1559 = vsel %vm309, %v1551, 0
      %v1562 = vsel %vm309, %v1552, 0
      %1564 = vmatpush.msra.mxu0 0.0
      %1565 = vmatpush.msra.mxu0 0.0
      %1566 = vmatpush.msra.mxu0 0.0
      %1567 = vmatpush.msra.mxu0 0.0
      %1568 = vmatpush.msra.mxu0 0.0
      %1569 = vmatpush.msra.mxu0 0.0
      %1570 = vmatpush.msra.mxu0 0.0
      %1571 = vmatpush.msra.mxu0 0.0
      %1572 = vmatpush.msra.mxu0 0.0
      %1573 = vmatpush.msra.mxu0 0.0
      %1574 = vmatpush.msra.mxu0 0.0
      %1575 = vmatpush.msra.mxu0 0.0
      %1576 = vmatpush.msra.mxu0 0.0
      %1577 = vmatpush.msra.mxu0 0.0
      %1578 = vmatpush.msra.mxu0 0.0
      %1579 = vmatpush.msra.mxu0 %v1559
      %1580 = vmatmul.f32.gmra.mxu0 %v1556
      %v1581 = vpop.f32.mrf.mxu0
      %v1582 = vadd.f32 0.0, %v1581
      %1583 = vdwg.mxu0
      %1584 = vmatpush.msra.mxu0 0.0
      %1585 = vmatpush.msra.mxu0 0.0
      %1586 = vmatpush.msra.mxu0 0.0
      %1587 = vmatpush.msra.mxu0 0.0
      %1588 = vmatpush.msra.mxu0 0.0
      %1589 = vmatpush.msra.mxu0 0.0
      %1590 = vmatpush.msra.mxu0 0.0
      %1591 = vmatpush.msra.mxu0 0.0
      %1592 = vmatpush.msra.mxu0 0.0
      %1593 = vmatpush.msra.mxu0 0.0
      %1594 = vmatpush.msra.mxu0 0.0
      %1595 = vmatpush.msra.mxu0 0.0
      %1596 = vmatpush.msra.mxu0 0.0
      %1597 = vmatpush.msra.mxu0 0.0
      %1598 = vmatpush.msra.mxu0 0.0
      %1599 = vmatpush.msra.mxu0 %v1562
      %1600 = vmatmul.f32.gmra.mxu0 %v1556
      %v1601 = vpop.f32.mrf.mxu0
      %v1602 = vadd.f32 0.0, %v1601
      %1603 = vdwg.mxu0
      %v1604 = vadd.f32 %v1529, %v1582
      %v1605 = vadd.f32 %v1530, %v1602
      %v1606 = vld [vmem:[%s4] sm:$0xf]
      %1608 = vset.pattern.permute.xlu0 0
      %1609 = vperm.xlu0 %1608, %v1606
      %v1610 = vpop.permute.xlu0 %1609
      %v1612 = vadd.f32 %v1604, %v1610
      %v1613 = vadd.f32 %v1605, %v1610
      %v1614 = vsel %vm309, %v1612, 0.0
      %v1615 = vsel %vm309, %v1613, 0.0
      %v1616 = vadd.f32 %v1614, %v1615
      %1617 = vadd.xlane.f32.xlu0 %v1616
      %v1618 = vpop.xlane.xlu0 %1617
      %v1619 = vmul.f32 %v1618, %v932
      %v1620 = vsub.f32 %v1612, %v1619
      %v1621 = vsub.f32 %v1613, %v1619
      %v1622 = vmul.f32 %v1620, %v1620
      %v1623 = vmul.f32 %v1621, %v1621
      %v1624 = vsel %vm309, %v1622, 0.0
      %v1625 = vsel %vm309, %v1623, 0.0
      %v1626 = vadd.f32 %v1624, %v1625
      %1627 = vadd.xlane.f32.xlu0 %v1626
      %v1628 = vpop.xlane.xlu0 %1627
      %v1629 = vmul.f32 %v1628, %v932
      %v1630 = vadd.f32 %v1629, 1e-05
      %v1631 = vrsqrt.pop %v1630
      %v1632 = vmul.f32 %v1631, %v1630
      %v1633 = vmul.f32 %v1632, %v1631
      %v1634 = vmul.f32 0.5, %v1633
      %v1635 = vsub.f32 1.5, %v1634
      %v1636 = vmul.f32 %v1631, %v1635
      %vm1637 = vweird.f32 %v1630
      %vm1638 = vweird.f32 %v1631
      %vm1639 = vmor %vm1637, %vm1638
      %v1640 = vsel %vm1639, %v1631, %v1636
      %v1641 = vmul.f32 %v1620, %v1640
      %v1642 = vmul.f32 %v1621, %v1640
      %v1643 = vld [vmem:[%s219 + $0x4] sm:$0xff]
      %1645 = vst [vmem:[#allocation1] ss:$2 sm:$0xff] %v1643
      %v1646 = vld.sshfl [vmem:[#allocation1] sm:$0xff pattern:$0x75316420]
      %v1647 = vld.sshfl [vmem:[#allocation1 + $0x8] sm:$0xff pattern:$0x75316420]
      %v1650 = vadd.f32 %v1641, %v1646
      %v1651 = vadd.f32 %v1642, %v1647
      %v1654 = vrot.slane %v1651, 4
      %v1655 = vsel %vm309, %v1650, %v1654
      %1657 = vst [vmem:[%s224] sm:$0xff] %v1655
      %p1658 = scmp.lt.s32.totalorder %s16, 1
      %s1659 = scalar_select %p1658, %s16, 1
      %s1660 = smul.addr %s1659, 2
      %s1661 = smul.addr %s1660, 4
      %s1662 = scalar_lea.vmem %s5, %s1661
      // Predicated region
      $region41: #{residual_block_forward.1} parent=39 // pred_check
        %p1663 = pneg %p144
      $region42: #{residual_block_forward.1} parent=39 // pred_check_branch
        %1665 = sbr.rel (%p1663) target = $region44
      $region43: #{residual_block_forward.1} parent=39 // pred_region
        _
      $region44: #{residual_block_forward.1} parent=39 // pred_fallthru
        _
    $region40: #{residual_block_forward.1} parent=5 // pred_fallthru
      _
    %p1666 = scmp.le.s32.totalorder 2, %s11
    // Predicated region
    $region45: #{residual_block_forward.1} parent=5 // pred_check
      %p1667 = pneg %p1666
    $region46: #{residual_block_forward.1} parent=5 // pred_check_branch
      %1669 = sbr.rel (%p1667) target = $region48
    $region47: #{residual_block_forward.1} parent=5 // pred_region
      %s1670 = ssub.s32 %s11, 2
      // Predicated region
      $region49: #{residual_block_forward.1} parent=47 // pred_check
        %p1671 = pneg %p150
      $region50: #{residual_block_forward.1} parent=47 // pred_check_branch
        %1673 = sbr.rel (%p1671) target = $region52
      $region51: #{residual_block_forward.1} parent=47 // pred_region
        %p1674 = scmp.lt.s32.totalorder %s17, 1
        %s1675 = scalar_select %p1674, %s17, 1
        %s1676 = smul.addr %s1675, 2
        %s1677 = smul.addr %s1676, 4
        %s1678 = scalar_lea.vmem %s5, %s1677
      $region52: #{residual_block_forward.1} parent=47 // pred_fallthru
        _
    $region48: #{residual_block_forward.1} parent=5 // pred_fallthru
      _
  $region6: #{residual_block_forward.1} parent=0 // loop_footer
    %s15 = sadd.s32 1, %s11
  $region7: #{residual_block_forward.1} parent=0 // loop_footer_branch
    %10 = sbr.rel target = $region3
  $region8: #{residual_block_forward.1} parent=0 // loop_exit
    _

</llo_original>
